<compile_context>
chip_gen: v7x
topology: tpu7x:2x2x1
jax: 0.10.0
libtpu: 0.0.40
codegen_flags: <defaults>
</compile_context>

<pallas_src>
import functools

import jax
import jax.numpy as jnp
from jax.experimental import pallas as pl
from jax.experimental.pallas import tpu as pltpu


def _sigmoid(x):
    return 1.0 / (1.0 + jnp.exp(-x))


def _dfem_kernel(d1_ref, d2_ref, w1t_ref, w2t_ref, wmask_ref, out_ref,
                 *, Bt, C, H, W):
    # d1_ref, d2_ref, out_ref : [Bt, C, H*W] VMEM blocks (lane-dense)
    # w1t_ref                 : [C, C//16]  VMEM (ChannelAttention fc1, transposed)
    # w2t_ref                 : [C//16, C]  VMEM (ChannelAttention fc2, transposed)
    # wmask_ref               : [49, H*W]   VMEM (7x7 weight * column-validity mask)
    HW = H * W
    pad = 3 * W + 3

    d1 = d1_ref[...].astype(jnp.float32)                     # [Bt, C, HW]
    d2 = d2_ref[...].astype(jnp.float32)
    mul_fuse = d1 * d2                                        # [Bt, C, HW]

    # ---- spatial attention: channel-max plane -> 7x7 conv (pad=3) -> sigmoid ----
    mx = jnp.max(mul_fuse, axis=1)                            # [Bt, HW]
    zpad = jnp.zeros((Bt, pad), jnp.float32)
    padded = jnp.concatenate([zpad, mx, zpad], axis=1)        # [Bt, HW + 6W + 6]
    wm = wmask_ref[...].astype(jnp.float32)                   # [49, HW]

    conv = None
    for dy in range(7):
        for dx in range(7):
            k = dy * 7 + dx
            start = dy * W + dx        # == (dy - 3) * W + (dx - 3) + pad
            tap = padded[:, start:start + HW]                 # [Bt, HW]
            term = tap * wm[k:k + 1, :]                       # weight & mask folded
            conv = term if conv is None else conv + term
    sa = _sigmoid(conv)[:, None, :]                           # [Bt, 1, HW]

    # ---- d_f = mul_fuse * sa + d1 ----
    d_f = mul_fuse * sa + d1                                  # [Bt, C, HW]

    # ---- channel attention: global max pool -> fc1 -> relu -> fc2 -> sigmoid ----
    pooled = jnp.max(d_f, axis=2)                             # [Bt, C]
    h = jnp.maximum(
        jnp.dot(pooled, w1t_ref[...].astype(jnp.float32),
                preferred_element_type=jnp.float32), 0.0)     # [Bt, C//16]
    ca = _sigmoid(
        jnp.dot(h, w2t_ref[...].astype(jnp.float32),
                preferred_element_type=jnp.float32))          # [Bt, C]

    # ---- d_out = d_f * ca + d1 (lane-dense store) ----
    out_ref[...] = (d_f * ca[:, :, None] + d1).astype(out_ref.dtype)


def _pick_block_batch(B, per_batch_bytes, target_bytes=2 * 1024 * 1024):
    """Largest Bt dividing B with block <= ~2 MiB and >= 2 grid steps (if B>=2)."""
    min_steps = 2 if B >= 2 else 1
    bt = 1
    for cand in range(1, B + 1):
        if (B % cand == 0 and cand * per_batch_bytes <= target_bytes
                and (B // cand) >= min_steps):
            bt = cand
    return bt


def dfem_forward(d1, d2, wsa, w1, w2, *, channels1, channels2, block_batch=None):
    if channels1 != channels2:
        # TODO(synk): channels1 != channels2 branch (UpsamplingBilinear2d +
        # DepthWiseConv + BatchNorm2d + ReLU "depth_context") not implemented.
        raise NotImplementedError(
            "DFEM Pallas kernel implements only the channels1 == channels2 path")

    B, C, H, W = d1.shape
    HW = H * W
    Cr = w1.shape[0]                       # C // 16

    # Lane-dense layout: flatten spatial so the minor dim is a multiple of 128.
    d1f = d1.reshape(B, C, HW)
    d2f = d2.reshape(B, C, HW)
    w1t = jnp.transpose(w1).astype(jnp.float32)   # [C, Cr]
    w2t = jnp.transpose(w2).astype(jnp.float32)   # [Cr, C]

    # Per-tap masked weights for the flattened 7x7 conv: row dy*7+dx holds
    # wsa[dy,dx] on output columns whose (col + dx - 3) stays inside the row,
    # and 0 where the flattened slice would wrap to an adjacent image row.
    # (Parameter-only, O(49*HW) work in the wrapper.)
    col = jnp.arange(HW, dtype=jnp.int32) % W
    colmask = jnp.stack(
        [((col + ox) >= 0) & ((col + ox) < W) for ox in range(-3, 4)],
        axis=0).astype(jnp.float32)                           # [7, HW]
    wmask = (wsa.astype(jnp.float32)[:, :, None]
             * colmask[None, :, :]).reshape(49, HW)           # [49, HW]

    itemsize = jnp.dtype(d1.dtype).itemsize
    per_batch_bytes = C * HW * itemsize
    Bt = block_batch if block_batch is not None else _pick_block_batch(
        B, per_batch_bytes)
    assert B % Bt == 0
    block_bytes = Bt * per_batch_bytes
    # 2 inputs + 1 output, double-buffered, plus small weights/masks + slack;
    # stays well inside v7x's 64 MiB physical VMEM.
    vmem_limit = int(min(48 * 1024 * 1024,
                         max(16 * 1024 * 1024, 8 * block_bytes + (4 << 20))))

    # TODO(synk): for shapes where one batch element exceeds the VMEM budget,
    # switch to a C-tiled two-pass structure (reduction grid axis + pl.when).
    kernel = functools.partial(_dfem_kernel, Bt=Bt, C=C, H=H, W=W)
    out_flat = pl.pallas_call(
        kernel,
        out_shape=jax.ShapeDtypeStruct((B, C, HW), d1.dtype),
        grid=(B // Bt,),
        in_specs=[
            pl.BlockSpec((Bt, C, HW), lambda b: (b, 0, 0)),
            pl.BlockSpec((Bt, C, HW), lambda b: (b, 0, 0)),
            pl.BlockSpec((C, Cr), lambda b: (0, 0)),
            pl.BlockSpec((Cr, C), lambda b: (0, 0)),
            pl.BlockSpec((49, HW), lambda b: (0, 0)),
        ],
        out_specs=pl.BlockSpec((Bt, C, HW), lambda b: (b, 0, 0)),
        compiler_params=pltpu.CompilerParams(
            dimension_semantics=("parallel",),
            vmem_limit_bytes=vmem_limit),
    )(d1f, d2f, w1t, w2t, wmask)
    return out_flat.reshape(B, C, H, W)


def dfem_reference(d1, d2, wsa, w1, w2):
    """Pure-JAX reference mirroring the PyTorch forward (channels1 == channels2)."""
    mul_fuse = d1 * d2
    mx = jnp.max(mul_fuse, axis=1, keepdims=True)                    # [B,1,H,W]
    conv = jax.lax.conv_general_dilated(
        mx, wsa.reshape(1, 1, 7, 7), window_strides=(1, 1),
        padding=((3, 3), (3, 3)),
        dimension_numbers=("NCHW", "OIHW", "NCHW"))
    sa = jax.nn.sigmoid(conv)
    d_f = mul_fuse * sa + d1
    pooled = jnp.max(d_f, axis=(2, 3))                               # [B,C]
    h = jnp.maximum(pooled @ w1.T, 0.0)                              # [B,C//16]
    ca = jax.nn.sigmoid(h @ w2.T)                                    # [B,C]
    return d_f * ca[:, :, None, None] + d1


if __name__ == "__main__":
    key = jax.random.PRNGKey(0)
    B, C, H, W = 2, 32, 16, 16          # channels1 == channels2 == 32 (>=16 for C//16)
    k1, k2, k3, k4, k5 = jax.random.split(key, 5)

    d1 = jax.random.normal(k1, (B, C, H, W), jnp.float32)
    d2 = jax.random.normal(k2, (B, C, H, W), jnp.float32)
    # deterministic synthetic parameters (shapes from the module __init__)
    wsa = jax.random.normal(k3, (7, 7), jnp.float32) * 0.1           # SpatialAttention.conv1
    w1 = jax.random.normal(k4, (C // 16, C), jnp.float32) * 0.1      # ChannelAttention.fc1
    w2 = jax.random.normal(k5, (C, C // 16), jnp.float32) * 0.1      # ChannelAttention.fc2

    out = dfem_forward(d1, d2, wsa, w1, w2, channels1=C, channels2=C)
    out = jax.block_until_ready(out)

    ref = dfem_reference(d1, d2, wsa, w1, w2)
    max_err = float(jnp.max(jnp.abs(out - ref)))
    assert jnp.allclose(out, ref, atol=1e-4, rtol=1e-4), f"max_err={max_err}"
    print("KERNEL_OK")
</pallas_src>

<mosaic_0001>
module attributes {stable_mosaic.version = 11 : i64} {
  func.func @_dfem_kernel(%arg0: i32, %arg1: memref<1x32x256xf32, #tpu.memory_space<vmem>>, %arg2: memref<1x32x256xf32, #tpu.memory_space<vmem>>, %arg3: memref<32x2xf32, #tpu.memory_space<vmem>>, %arg4: memref<2x32xf32, #tpu.memory_space<vmem>>, %arg5: memref<49x256xf32, #tpu.memory_space<vmem>>, %arg6: memref<1x32x256xf32, #tpu.memory_space<vmem>>) attributes {dimension_semantics = [#tpu.dimension_semantics<parallel>], iteration_bounds = array<i64: 2>, scalar_prefetch = 0 : i64, scratch_operands = 0 : i64, tpu.core_type = #tpu.core_type<tc>, window_params = [{transform_indices = @transform_0, window_bounds = array<i64: 1, 32, 256>}, {transform_indices = @transform_1, window_bounds = array<i64: 1, 32, 256>}, {pipeline_mode = #tpu.pipeline_mode<synchronous>, transform_indices = @transform_2, window_bounds = array<i64: 32, 2>}, {pipeline_mode = #tpu.pipeline_mode<synchronous>, transform_indices = @transform_3, window_bounds = array<i64: 2, 32>}, {pipeline_mode = #tpu.pipeline_mode<synchronous>, transform_indices = @transform_4, window_bounds = array<i64: 49, 256>}, {transform_indices = @transform_5, window_bounds = array<i64: 1, 32, 256>}]} {
    %c0 = arith.constant 0 : index
    %c0_0 = arith.constant 0 : index
    %c0_1 = arith.constant 0 : index
    %0 = vector.load %arg1[%c0, %c0_0, %c0_1] : memref<1x32x256xf32, #tpu.memory_space<vmem>>, vector<1x32x256xf32>
    %c0_2 = arith.constant 0 : index
    %c0_3 = arith.constant 0 : index
    %c0_4 = arith.constant 0 : index
    %1 = vector.load %arg2[%c0_2, %c0_3, %c0_4] : memref<1x32x256xf32, #tpu.memory_space<vmem>>, vector<1x32x256xf32>
    %2 = arith.mulf %0, %1 : vector<1x32x256xf32>
    %cst = arith.constant dense<0xFF800000> : vector<1x256xf32>
    %3 = vector.multi_reduction <maximumf>, %2, %cst [1] : vector<1x32x256xf32> to vector<1x256xf32>
    %cst_5 = arith.constant 0.000000e+00 : f32
    %4 = vector.broadcast %cst_5 : f32 to vector<1x51xf32>
    %5 = tpu.concatenate %4, %3, %4 in 1 : vector<1x51xf32>, vector<1x256xf32>, vector<1x51xf32> -> vector<1x358xf32>
    %c0_6 = arith.constant 0 : index
    %c0_7 = arith.constant 0 : index
    %6 = vector.load %arg5[%c0_6, %c0_7] : memref<49x256xf32, #tpu.memory_space<vmem>>, vector<49x256xf32>
    %7 = vector.extract_strided_slice %5 {offsets = [0, 0], sizes = [1, 256], strides = [1, 1]} : vector<1x358xf32> to vector<1x256xf32>
    %8 = vector.extract_strided_slice %6 {offsets = [0, 0], sizes = [1, 256], strides = [1, 1]} : vector<49x256xf32> to vector<1x256xf32>
    %9 = arith.mulf %7, %8 : vector<1x256xf32>
    %10 = vector.extract_strided_slice %5 {offsets = [0, 1], sizes = [1, 256], strides = [1, 1]} : vector<1x358xf32> to vector<1x256xf32>
    %11 = vector.extract_strided_slice %6 {offsets = [1, 0], sizes = [1, 256], strides = [1, 1]} : vector<49x256xf32> to vector<1x256xf32>
    %12 = arith.mulf %10, %11 : vector<1x256xf32>
    %13 = arith.addf %9, %12 : vector<1x256xf32>
    %14 = vector.extract_strided_slice %5 {offsets = [0, 2], sizes = [1, 256], strides = [1, 1]} : vector<1x358xf32> to vector<1x256xf32>
    %15 = vector.extract_strided_slice %6 {offsets = [2, 0], sizes = [1, 256], strides = [1, 1]} : vector<49x256xf32> to vector<1x256xf32>
    %16 = arith.mulf %14, %15 : vector<1x256xf32>
    %17 = arith.addf %13, %16 : vector<1x256xf32>
    %18 = vector.extract_strided_slice %5 {offsets = [0, 3], sizes = [1, 256], strides = [1, 1]} : vector<1x358xf32> to vector<1x256xf32>
    %19 = vector.extract_strided_slice %6 {offsets = [3, 0], sizes = [1, 256], strides = [1, 1]} : vector<49x256xf32> to vector<1x256xf32>
    %20 = arith.mulf %18, %19 : vector<1x256xf32>
    %21 = arith.addf %17, %20 : vector<1x256xf32>
    %22 = vector.extract_strided_slice %5 {offsets = [0, 4], sizes = [1, 256], strides = [1, 1]} : vector<1x358xf32> to vector<1x256xf32>
    %23 = vector.extract_strided_slice %6 {offsets = [4, 0], sizes = [1, 256], strides = [1, 1]} : vector<49x256xf32> to vector<1x256xf32>
    %24 = arith.mulf %22, %23 : vector<1x256xf32>
    %25 = arith.addf %21, %24 : vector<1x256xf32>
    %26 = vector.extract_strided_slice %5 {offsets = [0, 5], sizes = [1, 256], strides = [1, 1]} : vector<1x358xf32> to vector<1x256xf32>
    %27 = vector.extract_strided_slice %6 {offsets = [5, 0], sizes = [1, 256], strides = [1, 1]} : vector<49x256xf32> to vector<1x256xf32>
    %28 = arith.mulf %26, %27 : vector<1x256xf32>
    %29 = arith.addf %25, %28 : vector<1x256xf32>
    %30 = vector.extract_strided_slice %5 {offsets = [0, 6], sizes = [1, 256], strides = [1, 1]} : vector<1x358xf32> to vector<1x256xf32>
    %31 = vector.extract_strided_slice %6 {offsets = [6, 0], sizes = [1, 256], strides = [1, 1]} : vector<49x256xf32> to vector<1x256xf32>
    %32 = arith.mulf %30, %31 : vector<1x256xf32>
    %33 = arith.addf %29, %32 : vector<1x256xf32>
    %34 = vector.extract_strided_slice %5 {offsets = [0, 16], sizes = [1, 256], strides = [1, 1]} : vector<1x358xf32> to vector<1x256xf32>
    %35 = vector.extract_strided_slice %6 {offsets = [7, 0], sizes = [1, 256], strides = [1, 1]} : vector<49x256xf32> to vector<1x256xf32>
    %36 = arith.mulf %34, %35 : vector<1x256xf32>
    %37 = arith.addf %33, %36 : vector<1x256xf32>
    %38 = vector.extract_strided_slice %5 {offsets = [0, 17], sizes = [1, 256], strides = [1, 1]} : vector<1x358xf32> to vector<1x256xf32>
    %39 = vector.extract_strided_slice %6 {offsets = [8, 0], sizes = [1, 256], strides = [1, 1]} : vector<49x256xf32> to vector<1x256xf32>
    %40 = arith.mulf %38, %39 : vector<1x256xf32>
    %41 = arith.addf %37, %40 : vector<1x256xf32>
    %42 = vector.extract_strided_slice %5 {offsets = [0, 18], sizes = [1, 256], strides = [1, 1]} : vector<1x358xf32> to vector<1x256xf32>
    %43 = vector.extract_strided_slice %6 {offsets = [9, 0], sizes = [1, 256], strides = [1, 1]} : vector<49x256xf32> to vector<1x256xf32>
    %44 = arith.mulf %42, %43 : vector<1x256xf32>
    %45 = arith.addf %41, %44 : vector<1x256xf32>
    %46 = vector.extract_strided_slice %5 {offsets = [0, 19], sizes = [1, 256], strides = [1, 1]} : vector<1x358xf32> to vector<1x256xf32>
    %47 = vector.extract_strided_slice %6 {offsets = [10, 0], sizes = [1, 256], strides = [1, 1]} : vector<49x256xf32> to vector<1x256xf32>
    %48 = arith.mulf %46, %47 : vector<1x256xf32>
    %49 = arith.addf %45, %48 : vector<1x256xf32>
    %50 = vector.extract_strided_slice %5 {offsets = [0, 20], sizes = [1, 256], strides = [1, 1]} : vector<1x358xf32> to vector<1x256xf32>
    %51 = vector.extract_strided_slice %6 {offsets = [11, 0], sizes = [1, 256], strides = [1, 1]} : vector<49x256xf32> to vector<1x256xf32>
    %52 = arith.mulf %50, %51 : vector<1x256xf32>
    %53 = arith.addf %49, %52 : vector<1x256xf32>
    %54 = vector.extract_strided_slice %5 {offsets = [0, 21], sizes = [1, 256], strides = [1, 1]} : vector<1x358xf32> to vector<1x256xf32>
    %55 = vector.extract_strided_slice %6 {offsets = [12, 0], sizes = [1, 256], strides = [1, 1]} : vector<49x256xf32> to vector<1x256xf32>
    %56 = arith.mulf %54, %55 : vector<1x256xf32>
    %57 = arith.addf %53, %56 : vector<1x256xf32>
    %58 = vector.extract_strided_slice %5 {offsets = [0, 22], sizes = [1, 256], strides = [1, 1]} : vector<1x358xf32> to vector<1x256xf32>
    %59 = vector.extract_strided_slice %6 {offsets = [13, 0], sizes = [1, 256], strides = [1, 1]} : vector<49x256xf32> to vector<1x256xf32>
    %60 = arith.mulf %58, %59 : vector<1x256xf32>
    %61 = arith.addf %57, %60 : vector<1x256xf32>
    %62 = vector.extract_strided_slice %5 {offsets = [0, 32], sizes = [1, 256], strides = [1, 1]} : vector<1x358xf32> to vector<1x256xf32>
    %63 = vector.extract_strided_slice %6 {offsets = [14, 0], sizes = [1, 256], strides = [1, 1]} : vector<49x256xf32> to vector<1x256xf32>
    %64 = arith.mulf %62, %63 : vector<1x256xf32>
    %65 = arith.addf %61, %64 : vector<1x256xf32>
    %66 = vector.extract_strided_slice %5 {offsets = [0, 33], sizes = [1, 256], strides = [1, 1]} : vector<1x358xf32> to vector<1x256xf32>
    %67 = vector.extract_strided_slice %6 {offsets = [15, 0], sizes = [1, 256], strides = [1, 1]} : vector<49x256xf32> to vector<1x256xf32>
    %68 = arith.mulf %66, %67 : vector<1x256xf32>
    %69 = arith.addf %65, %68 : vector<1x256xf32>
    %70 = vector.extract_strided_slice %5 {offsets = [0, 34], sizes = [1, 256], strides = [1, 1]} : vector<1x358xf32> to vector<1x256xf32>
    %71 = vector.extract_strided_slice %6 {offsets = [16, 0], sizes = [1, 256], strides = [1, 1]} : vector<49x256xf32> to vector<1x256xf32>
    %72 = arith.mulf %70, %71 : vector<1x256xf32>
    %73 = arith.addf %69, %72 : vector<1x256xf32>
    %74 = vector.extract_strided_slice %5 {offsets = [0, 35], sizes = [1, 256], strides = [1, 1]} : vector<1x358xf32> to vector<1x256xf32>
    %75 = vector.extract_strided_slice %6 {offsets = [17, 0], sizes = [1, 256], strides = [1, 1]} : vector<49x256xf32> to vector<1x256xf32>
    %76 = arith.mulf %74, %75 : vector<1x256xf32>
    %77 = arith.addf %73, %76 : vector<1x256xf32>
    %78 = vector.extract_strided_slice %5 {offsets = [0, 36], sizes = [1, 256], strides = [1, 1]} : vector<1x358xf32> to vector<1x256xf32>
    %79 = vector.extract_strided_slice %6 {offsets = [18, 0], sizes = [1, 256], strides = [1, 1]} : vector<49x256xf32> to vector<1x256xf32>
    %80 = arith.mulf %78, %79 : vector<1x256xf32>
    %81 = arith.addf %77, %80 : vector<1x256xf32>
    %82 = vector.extract_strided_slice %5 {offsets = [0, 37], sizes = [1, 256], strides = [1, 1]} : vector<1x358xf32> to vector<1x256xf32>
    %83 = vector.extract_strided_slice %6 {offsets = [19, 0], sizes = [1, 256], strides = [1, 1]} : vector<49x256xf32> to vector<1x256xf32>
    %84 = arith.mulf %82, %83 : vector<1x256xf32>
    %85 = arith.addf %81, %84 : vector<1x256xf32>
    %86 = vector.extract_strided_slice %5 {offsets = [0, 38], sizes = [1, 256], strides = [1, 1]} : vector<1x358xf32> to vector<1x256xf32>
    %87 = vector.extract_strided_slice %6 {offsets = [20, 0], sizes = [1, 256], strides = [1, 1]} : vector<49x256xf32> to vector<1x256xf32>
    %88 = arith.mulf %86, %87 : vector<1x256xf32>
    %89 = arith.addf %85, %88 : vector<1x256xf32>
    %90 = vector.extract_strided_slice %5 {offsets = [0, 48], sizes = [1, 256], strides = [1, 1]} : vector<1x358xf32> to vector<1x256xf32>
    %91 = vector.extract_strided_slice %6 {offsets = [21, 0], sizes = [1, 256], strides = [1, 1]} : vector<49x256xf32> to vector<1x256xf32>
    %92 = arith.mulf %90, %91 : vector<1x256xf32>
    %93 = arith.addf %89, %92 : vector<1x256xf32>
    %94 = vector.extract_strided_slice %5 {offsets = [0, 49], sizes = [1, 256], strides = [1, 1]} : vector<1x358xf32> to vector<1x256xf32>
    %95 = vector.extract_strided_slice %6 {offsets = [22, 0], sizes = [1, 256], strides = [1, 1]} : vector<49x256xf32> to vector<1x256xf32>
    %96 = arith.mulf %94, %95 : vector<1x256xf32>
    %97 = arith.addf %93, %96 : vector<1x256xf32>
    %98 = vector.extract_strided_slice %5 {offsets = [0, 50], sizes = [1, 256], strides = [1, 1]} : vector<1x358xf32> to vector<1x256xf32>
    %99 = vector.extract_strided_slice %6 {offsets = [23, 0], sizes = [1, 256], strides = [1, 1]} : vector<49x256xf32> to vector<1x256xf32>
    %100 = arith.mulf %98, %99 : vector<1x256xf32>
    %101 = arith.addf %97, %100 : vector<1x256xf32>
    %102 = vector.extract_strided_slice %5 {offsets = [0, 51], sizes = [1, 256], strides = [1, 1]} : vector<1x358xf32> to vector<1x256xf32>
    %103 = vector.extract_strided_slice %6 {offsets = [24, 0], sizes = [1, 256], strides = [1, 1]} : vector<49x256xf32> to vector<1x256xf32>
    %104 = arith.mulf %102, %103 : vector<1x256xf32>
    %105 = arith.addf %101, %104 : vector<1x256xf32>
    %106 = vector.extract_strided_slice %5 {offsets = [0, 52], sizes = [1, 256], strides = [1, 1]} : vector<1x358xf32> to vector<1x256xf32>
    %107 = vector.extract_strided_slice %6 {offsets = [25, 0], sizes = [1, 256], strides = [1, 1]} : vector<49x256xf32> to vector<1x256xf32>
    %108 = arith.mulf %106, %107 : vector<1x256xf32>
    %109 = arith.addf %105, %108 : vector<1x256xf32>
    %110 = vector.extract_strided_slice %5 {offsets = [0, 53], sizes = [1, 256], strides = [1, 1]} : vector<1x358xf32> to vector<1x256xf32>
    %111 = vector.extract_strided_slice %6 {offsets = [26, 0], sizes = [1, 256], strides = [1, 1]} : vector<49x256xf32> to vector<1x256xf32>
    %112 = arith.mulf %110, %111 : vector<1x256xf32>
    %113 = arith.addf %109, %112 : vector<1x256xf32>
    %114 = vector.extract_strided_slice %5 {offsets = [0, 54], sizes = [1, 256], strides = [1, 1]} : vector<1x358xf32> to vector<1x256xf32>
    %115 = vector.extract_strided_slice %6 {offsets = [27, 0], sizes = [1, 256], strides = [1, 1]} : vector<49x256xf32> to vector<1x256xf32>
    %116 = arith.mulf %114, %115 : vector<1x256xf32>
    %117 = arith.addf %113, %116 : vector<1x256xf32>
    %118 = vector.extract_strided_slice %5 {offsets = [0, 64], sizes = [1, 256], strides = [1, 1]} : vector<1x358xf32> to vector<1x256xf32>
    %119 = vector.extract_strided_slice %6 {offsets = [28, 0], sizes = [1, 256], strides = [1, 1]} : vector<49x256xf32> to vector<1x256xf32>
    %120 = arith.mulf %118, %119 : vector<1x256xf32>
    %121 = arith.addf %117, %120 : vector<1x256xf32>
    %122 = vector.extract_strided_slice %5 {offsets = [0, 65], sizes = [1, 256], strides = [1, 1]} : vector<1x358xf32> to vector<1x256xf32>
    %123 = vector.extract_strided_slice %6 {offsets = [29, 0], sizes = [1, 256], strides = [1, 1]} : vector<49x256xf32> to vector<1x256xf32>
    %124 = arith.mulf %122, %123 : vector<1x256xf32>
    %125 = arith.addf %121, %124 : vector<1x256xf32>
    %126 = vector.extract_strided_slice %5 {offsets = [0, 66], sizes = [1, 256], strides = [1, 1]} : vector<1x358xf32> to vector<1x256xf32>
    %127 = vector.extract_strided_slice %6 {offsets = [30, 0], sizes = [1, 256], strides = [1, 1]} : vector<49x256xf32> to vector<1x256xf32>
    %128 = arith.mulf %126, %127 : vector<1x256xf32>
    %129 = arith.addf %125, %128 : vector<1x256xf32>
    %130 = vector.extract_strided_slice %5 {offsets = [0, 67], sizes = [1, 256], strides = [1, 1]} : vector<1x358xf32> to vector<1x256xf32>
    %131 = vector.extract_strided_slice %6 {offsets = [31, 0], sizes = [1, 256], strides = [1, 1]} : vector<49x256xf32> to vector<1x256xf32>
    %132 = arith.mulf %130, %131 : vector<1x256xf32>
    %133 = arith.addf %129, %132 : vector<1x256xf32>
    %134 = vector.extract_strided_slice %5 {offsets = [0, 68], sizes = [1, 256], strides = [1, 1]} : vector<1x358xf32> to vector<1x256xf32>
    %135 = vector.extract_strided_slice %6 {offsets = [32, 0], sizes = [1, 256], strides = [1, 1]} : vector<49x256xf32> to vector<1x256xf32>
    %136 = arith.mulf %134, %135 : vector<1x256xf32>
    %137 = arith.addf %133, %136 : vector<1x256xf32>
    %138 = vector.extract_strided_slice %5 {offsets = [0, 69], sizes = [1, 256], strides = [1, 1]} : vector<1x358xf32> to vector<1x256xf32>
    %139 = vector.extract_strided_slice %6 {offsets = [33, 0], sizes = [1, 256], strides = [1, 1]} : vector<49x256xf32> to vector<1x256xf32>
    %140 = arith.mulf %138, %139 : vector<1x256xf32>
    %141 = arith.addf %137, %140 : vector<1x256xf32>
    %142 = vector.extract_strided_slice %5 {offsets = [0, 70], sizes = [1, 256], strides = [1, 1]} : vector<1x358xf32> to vector<1x256xf32>
    %143 = vector.extract_strided_slice %6 {offsets = [34, 0], sizes = [1, 256], strides = [1, 1]} : vector<49x256xf32> to vector<1x256xf32>
    %144 = arith.mulf %142, %143 : vector<1x256xf32>
    %145 = arith.addf %141, %144 : vector<1x256xf32>
    %146 = vector.extract_strided_slice %5 {offsets = [0, 80], sizes = [1, 256], strides = [1, 1]} : vector<1x358xf32> to vector<1x256xf32>
    %147 = vector.extract_strided_slice %6 {offsets = [35, 0], sizes = [1, 256], strides = [1, 1]} : vector<49x256xf32> to vector<1x256xf32>
    %148 = arith.mulf %146, %147 : vector<1x256xf32>
    %149 = arith.addf %145, %148 : vector<1x256xf32>
    %150 = vector.extract_strided_slice %5 {offsets = [0, 81], sizes = [1, 256], strides = [1, 1]} : vector<1x358xf32> to vector<1x256xf32>
    %151 = vector.extract_strided_slice %6 {offsets = [36, 0], sizes = [1, 256], strides = [1, 1]} : vector<49x256xf32> to vector<1x256xf32>
    %152 = arith.mulf %150, %151 : vector<1x256xf32>
    %153 = arith.addf %149, %152 : vector<1x256xf32>
    %154 = vector.extract_strided_slice %5 {offsets = [0, 82], sizes = [1, 256], strides = [1, 1]} : vector<1x358xf32> to vector<1x256xf32>
    %155 = vector.extract_strided_slice %6 {offsets = [37, 0], sizes = [1, 256], strides = [1, 1]} : vector<49x256xf32> to vector<1x256xf32>
    %156 = arith.mulf %154, %155 : vector<1x256xf32>
    %157 = arith.addf %153, %156 : vector<1x256xf32>
    %158 = vector.extract_strided_slice %5 {offsets = [0, 83], sizes = [1, 256], strides = [1, 1]} : vector<1x358xf32> to vector<1x256xf32>
    %159 = vector.extract_strided_slice %6 {offsets = [38, 0], sizes = [1, 256], strides = [1, 1]} : vector<49x256xf32> to vector<1x256xf32>
    %160 = arith.mulf %158, %159 : vector<1x256xf32>
    %161 = arith.addf %157, %160 : vector<1x256xf32>
    %162 = vector.extract_strided_slice %5 {offsets = [0, 84], sizes = [1, 256], strides = [1, 1]} : vector<1x358xf32> to vector<1x256xf32>
    %163 = vector.extract_strided_slice %6 {offsets = [39, 0], sizes = [1, 256], strides = [1, 1]} : vector<49x256xf32> to vector<1x256xf32>
    %164 = arith.mulf %162, %163 : vector<1x256xf32>
    %165 = arith.addf %161, %164 : vector<1x256xf32>
    %166 = vector.extract_strided_slice %5 {offsets = [0, 85], sizes = [1, 256], strides = [1, 1]} : vector<1x358xf32> to vector<1x256xf32>
    %167 = vector.extract_strided_slice %6 {offsets = [40, 0], sizes = [1, 256], strides = [1, 1]} : vector<49x256xf32> to vector<1x256xf32>
    %168 = arith.mulf %166, %167 : vector<1x256xf32>
    %169 = arith.addf %165, %168 : vector<1x256xf32>
    %170 = vector.extract_strided_slice %5 {offsets = [0, 86], sizes = [1, 256], strides = [1, 1]} : vector<1x358xf32> to vector<1x256xf32>
    %171 = vector.extract_strided_slice %6 {offsets = [41, 0], sizes = [1, 256], strides = [1, 1]} : vector<49x256xf32> to vector<1x256xf32>
    %172 = arith.mulf %170, %171 : vector<1x256xf32>
    %173 = arith.addf %169, %172 : vector<1x256xf32>
    %174 = vector.extract_strided_slice %5 {offsets = [0, 96], sizes = [1, 256], strides = [1, 1]} : vector<1x358xf32> to vector<1x256xf32>
    %175 = vector.extract_strided_slice %6 {offsets = [42, 0], sizes = [1, 256], strides = [1, 1]} : vector<49x256xf32> to vector<1x256xf32>
    %176 = arith.mulf %174, %175 : vector<1x256xf32>
    %177 = arith.addf %173, %176 : vector<1x256xf32>
    %178 = vector.extract_strided_slice %5 {offsets = [0, 97], sizes = [1, 256], strides = [1, 1]} : vector<1x358xf32> to vector<1x256xf32>
    %179 = vector.extract_strided_slice %6 {offsets = [43, 0], sizes = [1, 256], strides = [1, 1]} : vector<49x256xf32> to vector<1x256xf32>
    %180 = arith.mulf %178, %179 : vector<1x256xf32>
    %181 = arith.addf %177, %180 : vector<1x256xf32>
    %182 = vector.extract_strided_slice %5 {offsets = [0, 98], sizes = [1, 256], strides = [1, 1]} : vector<1x358xf32> to vector<1x256xf32>
    %183 = vector.extract_strided_slice %6 {offsets = [44, 0], sizes = [1, 256], strides = [1, 1]} : vector<49x256xf32> to vector<1x256xf32>
    %184 = arith.mulf %182, %183 : vector<1x256xf32>
    %185 = arith.addf %181, %184 : vector<1x256xf32>
    %186 = vector.extract_strided_slice %5 {offsets = [0, 99], sizes = [1, 256], strides = [1, 1]} : vector<1x358xf32> to vector<1x256xf32>
    %187 = vector.extract_strided_slice %6 {offsets = [45, 0], sizes = [1, 256], strides = [1, 1]} : vector<49x256xf32> to vector<1x256xf32>
    %188 = arith.mulf %186, %187 : vector<1x256xf32>
    %189 = arith.addf %185, %188 : vector<1x256xf32>
    %190 = vector.extract_strided_slice %5 {offsets = [0, 100], sizes = [1, 256], strides = [1, 1]} : vector<1x358xf32> to vector<1x256xf32>
    %191 = vector.extract_strided_slice %6 {offsets = [46, 0], sizes = [1, 256], strides = [1, 1]} : vector<49x256xf32> to vector<1x256xf32>
    %192 = arith.mulf %190, %191 : vector<1x256xf32>
    %193 = arith.addf %189, %192 : vector<1x256xf32>
    %194 = vector.extract_strided_slice %5 {offsets = [0, 101], sizes = [1, 256], strides = [1, 1]} : vector<1x358xf32> to vector<1x256xf32>
    %195 = vector.extract_strided_slice %6 {offsets = [47, 0], sizes = [1, 256], strides = [1, 1]} : vector<49x256xf32> to vector<1x256xf32>
    %196 = arith.mulf %194, %195 : vector<1x256xf32>
    %197 = arith.addf %193, %196 : vector<1x256xf32>
    %198 = vector.extract_strided_slice %5 {offsets = [0, 102], sizes = [1, 256], strides = [1, 1]} : vector<1x358xf32> to vector<1x256xf32>
    %199 = vector.extract_strided_slice %6 {offsets = [48, 0], sizes = [1, 256], strides = [1, 1]} : vector<49x256xf32> to vector<1x256xf32>
    %200 = arith.mulf %198, %199 : vector<1x256xf32>
    %201 = arith.addf %197, %200 : vector<1x256xf32>
    %cst_8 = arith.constant 0.000000e+00 : f32
    %202 = vector.broadcast %cst_8 : f32 to vector<1x256xf32>
    %203 = arith.subf %202, %201 : vector<1x256xf32>
    %204 = math.exp %203 : vector<1x256xf32>
    %cst_9 = arith.constant 1.000000e+00 : f32
    %205 = vector.broadcast %cst_9 : f32 to vector<1x256xf32>
    %206 = arith.addf %205, %204 : vector<1x256xf32>
    %cst_10 = arith.constant 1.000000e+00 : f32
    %207 = vector.broadcast %cst_10 : f32 to vector<1x256xf32>
    %208 = arith.divf %207, %206 : vector<1x256xf32>
    %209 = vector.shape_cast %208 : vector<1x256xf32> to vector<1x1x256xf32>
    %210 = vector.broadcast %209 : vector<1x1x256xf32> to vector<1x32x256xf32>
    %211 = arith.mulf %2, %210 : vector<1x32x256xf32>
    %212 = arith.addf %211, %0 : vector<1x32x256xf32>
    %cst_11 = arith.constant dense<0xFF800000> : vector<1x32xf32>
    %213 = vector.multi_reduction <maximumf>, %212, %cst_11 [2] : vector<1x32x256xf32> to vector<1x32xf32>
    %c0_12 = arith.constant 0 : index
    %c0_13 = arith.constant 0 : index
    %214 = vector.load %arg3[%c0_12, %c0_13] : memref<32x2xf32, #tpu.memory_space<vmem>>, vector<32x2xf32>
    %cst_14 = arith.constant dense<0.000000e+00> : vector<1x2xf32>
    %215 = tpu.matmul %213, %214, %cst_14 {dimension_numbers = #tpu.dot_dimension_numbers<[1], [0], [0], [1], [0, 0, 1, 1], [], []>} : vector<1x32xf32>, vector<32x2xf32>, vector<1x2xf32> -> vector<1x2xf32>
    %cst_15 = arith.constant 0.000000e+00 : f32
    %216 = vector.broadcast %cst_15 : f32 to vector<1x2xf32>
    %217 = arith.maximumf %215, %216 : vector<1x2xf32>
    %c0_16 = arith.constant 0 : index
    %c0_17 = arith.constant 0 : index
    %218 = vector.load %arg4[%c0_16, %c0_17] : memref<2x32xf32, #tpu.memory_space<vmem>>, vector<2x32xf32>
    %cst_18 = arith.constant dense<0.000000e+00> : vector<1x32xf32>
    %219 = tpu.matmul %217, %218, %cst_18 {dimension_numbers = #tpu.dot_dimension_numbers<[1], [0], [0], [1], [0, 0, 1, 1], [], []>} : vector<1x2xf32>, vector<2x32xf32>, vector<1x32xf32> -> vector<1x32xf32>
    %cst_19 = arith.constant 0.000000e+00 : f32
    %220 = vector.broadcast %cst_19 : f32 to vector<1x32xf32>
    %221 = arith.subf %220, %219 : vector<1x32xf32>
    %222 = math.exp %221 : vector<1x32xf32>
    %cst_20 = arith.constant 1.000000e+00 : f32
    %223 = vector.broadcast %cst_20 : f32 to vector<1x32xf32>
    %224 = arith.addf %223, %222 : vector<1x32xf32>
    %cst_21 = arith.constant 1.000000e+00 : f32
    %225 = vector.broadcast %cst_21 : f32 to vector<1x32xf32>
    %226 = arith.divf %225, %224 : vector<1x32xf32>
    %227 = vector.shape_cast %226 : vector<1x32xf32> to vector<1x32x1xf32>
    %228 = vector.broadcast %227 : vector<1x32x1xf32> to vector<1x32x256xf32>
    %229 = arith.mulf %212, %228 : vector<1x32x256xf32>
    %230 = arith.addf %229, %0 : vector<1x32x256xf32>
    %c0_22 = arith.constant 0 : index
    %c0_23 = arith.constant 0 : index
    %c0_24 = arith.constant 0 : index
    %231 = vector.load %arg6[%c0_22, %c0_23, %c0_24] : memref<1x32x256xf32, #tpu.memory_space<vmem>>, vector<1x32x256xf32>
    tpu.vector_store %arg6[%c0_22, %c0_23, %c0_24], %230 {strides = array<i32>} : memref<1x32x256xf32, #tpu.memory_space<vmem>>, vector<1x32x256xf32>,
    return
  }
  func.func @transform_0(%arg0: i32) -> (i32, i32, i32) {
    %c0_i32 = arith.constant 0 : i32
    %c0_i32_0 = arith.constant 0 : i32
    %c0_i32_1 = arith.constant 0 : i32
    return %arg0, %c0_i32, %c0_i32_0 : i32, i32, i32
  }
  func.func @transform_1(%arg0: i32) -> (i32, i32, i32) {
    %c0_i32 = arith.constant 0 : i32
    %c0_i32_0 = arith.constant 0 : i32
    %c0_i32_1 = arith.constant 0 : i32
    return %arg0, %c0_i32, %c0_i32_0 : i32, i32, i32
  }
  func.func @transform_2(%arg0: i32) -> (i32, i32) {
    %c0_i32 = arith.constant 0 : i32
    %c0_i32_0 = arith.constant 0 : i32
    %c0_i32_1 = arith.constant 0 : i32
    return %c0_i32, %c0_i32_0 : i32, i32
  }
  func.func @transform_3(%arg0: i32) -> (i32, i32) {
    %c0_i32 = arith.constant 0 : i32
    %c0_i32_0 = arith.constant 0 : i32
    %c0_i32_1 = arith.constant 0 : i32
    return %c0_i32, %c0_i32_0 : i32, i32
  }
  func.func @transform_4(%arg0: i32) -> (i32, i32) {
    %c0_i32 = arith.constant 0 : i32
    %c0_i32_0 = arith.constant 0 : i32
    %c0_i32_1 = arith.constant 0 : i32
    return %c0_i32, %c0_i32_0 : i32, i32
  }
  func.func @transform_5(%arg0: i32) -> (i32, i32, i32) {
    %c0_i32 = arith.constant 0 : i32
    %c0_i32_0 = arith.constant 0 : i32
    %c0_i32_1 = arith.constant 0 : i32
    return %arg0, %c0_i32, %c0_i32_0 : i32, i32, i32
  }
}

</mosaic_0001>

<llo_original>
// kernel: tpu_custom_call.1
$region0: #{tpu_custom_call.1}
  #allocation0 [shape = 'u32[]', space=smem, size = 0x4, offset = 0x4, fixed_abs, tag = 'smem constant byte address 0x4 - core index']
  #allocation1 [shape = 'u32[144,128]{1,0:T(1,128)}', space=vmem, size = 0x12000, scoped, tag = 'internal scratch']
  %s0 = inlined_call_operand.hbm [shape: f32[2,32,256], index: 0, kind: input, shape index: {}]
  %s1 = inlined_call_operand.hbm [shape: f32[2,32,256], index: 1, kind: input, shape index: {}]
  %s2 = inlined_call_operand.vmem [shape: f32[32,2], index: 2, kind: input, shape index: {}]
  %s3 = inlined_call_operand.vmem [shape: f32[2,32], index: 3, kind: input, shape index: {}]
  %s4 = inlined_call_operand.hbm [shape: f32[49,256], index: 4, kind: input, shape index: {}]
  %s5 = inlined_call_operand.hbm [shape: f32[2,32,256], index: 5, kind: output, shape index: {}]
  %s6 = sld [smem:[#allocation0]]
  $region65: #{tpu_custom_call.1} parent=0
    _
  %s8 = ssub.s32 1, %s6
  %s9 = scalar_select 0, %s8, %s6
  $region1: #{tpu_custom_call.1} parent=0
    #allocation2 [shape = 'u8[65536]{0}', space=vmem, size = 0x10000, scoped, tag = 'input window, operand 0']
    #allocation3 [shape = 's32[2]{0}', space=sflag, size = 0x8, scoped, tag = 'scoped memory for tpu_custom_call.1']
    #allocation4 [shape = 's32[2]{0}', space=sflag, size = 0x8, scoped, tag = 'scoped memory for tpu_custom_call.1']
    #allocation5 [shape = 'u8[65536]{0}', space=vmem, size = 0x10000, scoped, tag = 'input window, operand 1']
    #allocation6 [shape = 's32[2]{0}', space=sflag, size = 0x8, scoped, tag = 'scoped memory for tpu_custom_call.1']
    #allocation7 [shape = 'u8[57344]{0}', space=vmem, size = 0xe000, scoped, tag = 'input window, operand 4, single buffered']
    #allocation8 [shape = 'u8[65536]{0}', space=vmem, size = 0x10000, scoped, tag = 'output window, operand 0']
    %10 = vsyncpa [#allocation3], 0
    %s11 = scalar_lea.sflag [#allocation3], 1
    %12 = vsyncpa %s11, 0
    %13 = vsyncpa [#allocation6], 0
    %s14 = scalar_lea.sflag [#allocation6], 1
    %15 = vsyncpa %s14, 0
    %16 = vsyncpa [#allocation4], 0
    %s17 = scalar_lea.sflag [#allocation4], 1
    %18 = vsyncpa %s17, 0
    loop: start=0, step=1, limit=4
    $region2: #{tpu_custom_call.1} parent=1 // loop_pre_header
      _
    $region3: #{tpu_custom_call.1} parent=1 // loop_header
      %s20 = sphi 0, %s24
      %p21 = scmp.ge.s32.totalorder %s20, 4
      %s30 = sphi 0, %s32
      %s33 = sphi 0, %s30
      %s34 = sphi 0, %s33
      %s50 = sphi 0, %s34
      %s56 = sphi 0, %s58
      %s59 = sphi 0, %s56
      %s60 = sphi 0, %s59
      %s76 = sphi 0, %s60
      %s80 = sphi 0, %s80
      %s82 = sphi 0, %s80
      %s83 = sphi 0, %s82
      %s97 = sphi 0, %s83
      %s101 = sphi 0, %s101
      %s103 = sphi 0, %s101
      %s104 = sphi 0, %s103
      %s118 = sphi 0, %s104
      %s122 = sphi 0, %s122
      %s124 = sphi 0, %s122
      %s125 = sphi 0, %s124
      %s139 = sphi 0, %s125
      %s145 = sphi 0, %s147
      %s148 = sphi 0, %s145
      %s149 = sphi 0, %s148
      %s165 = sphi 0, %s149
    $region4: #{tpu_custom_call.1} parent=1 // loop_header_branch
      %23 = sbr.rel (%p21) target = $region8
    $region5: #{tpu_custom_call.1} parent=1 // loop_body
      %s25 = ssub.s32 %s20, 1
      %s26 = ssub.s32 %s20, 2
      %s27 = sadd.s32 %s20, 1
      %s28 = ssub.s32 %s20, %s27
      %p29 = scmp.eq.s32.totalorder %s28, 0
      %s31 = sadd.s32 %s30, 1
      %s32 = scalar_select %p29, %s30, %s31
      %p35 = pneg %p29
      %p36 = scmp.eq.s32.totalorder %s20, 1
      %p37 = por %p35, %p36
      %p38 = scmp.ne.s32.totalorder %s30, %s33
      %p39 = scmp.eq.s32.totalorder %s20, 0
      %p40 = por %p38, %p39
      %p41 = scmp.ne.s32.totalorder %s30, %s33
      %p42 = scmp.eq.s32.totalorder %s25, 1
      %p43 = por %p41, %p42
      %p44 = scmp.ne.s32.totalorder %s33, %s34
      %p45 = scmp.eq.s32.totalorder %s25, 0
      %p46 = por %p44, %p45
      %p47 = scmp.ne.s32.totalorder %s33, %s34
      %p48 = scmp.eq.s32.totalorder %s26, 1
      %p49 = por %p47, %p48
      %p51 = scmp.ne.s32.totalorder %s34, %s50
      %p52 = scmp.eq.s32.totalorder %s26, 0
      %p53 = por %p51, %p52
      %s54 = ssub.s32 %s20, %s27
      %p55 = scmp.eq.s32.totalorder %s54, 0
      %s57 = sadd.s32 %s56, 1
      %s58 = scalar_select %p55, %s56, %s57
      %p61 = pneg %p55
      %p62 = scmp.eq.s32.totalorder %s20, 1
      %p63 = por %p61, %p62
      %p64 = scmp.ne.s32.totalorder %s56, %s59
      %p65 = scmp.eq.s32.totalorder %s20, 0
      %p66 = por %p64, %p65
      %p67 = scmp.ne.s32.totalorder %s56, %s59
      %p68 = scmp.eq.s32.totalorder %s25, 1
      %p69 = por %p67, %p68
      %p70 = scmp.ne.s32.totalorder %s59, %s60
      %p71 = scmp.eq.s32.totalorder %s25, 0
      %p72 = por %p70, %p71
      %p73 = scmp.ne.s32.totalorder %s59, %s60
      %p74 = scmp.eq.s32.totalorder %s26, 1
      %p75 = por %p73, %p74
      %p77 = scmp.ne.s32.totalorder %s60, %s76
      %p78 = scmp.eq.s32.totalorder %s26, 0
      %p79 = por %p77, %p78
      %s81 = sadd.s32 %s80, 1
      %p84 = scmp.eq.s32.totalorder %s20, 1
      %p85 = scmp.ne.s32.totalorder %s80, %s82
      %p86 = scmp.eq.s32.totalorder %s20, 0
      %p87 = por %p85, %p86
      %p88 = scmp.ne.s32.totalorder %s80, %s82
      %p89 = scmp.eq.s32.totalorder %s25, 1
      %p90 = por %p88, %p89
      %p91 = scmp.ne.s32.totalorder %s82, %s83
      %p92 = scmp.eq.s32.totalorder %s25, 0
      %p93 = por %p91, %p92
      %p94 = scmp.ne.s32.totalorder %s82, %s83
      %p95 = scmp.eq.s32.totalorder %s26, 1
      %p96 = por %p94, %p95
      %p98 = scmp.ne.s32.totalorder %s83, %s97
      %p99 = scmp.eq.s32.totalorder %s26, 0
      %p100 = por %p98, %p99
      %s102 = sadd.s32 %s101, 1
      %p105 = scmp.eq.s32.totalorder %s20, 1
      %p106 = scmp.ne.s32.totalorder %s101, %s103
      %p107 = scmp.eq.s32.totalorder %s20, 0
      %p108 = por %p106, %p107
      %p109 = scmp.ne.s32.totalorder %s101, %s103
      %p110 = scmp.eq.s32.totalorder %s25, 1
      %p111 = por %p109, %p110
      %p112 = scmp.ne.s32.totalorder %s103, %s104
      %p113 = scmp.eq.s32.totalorder %s25, 0
      %p114 = por %p112, %p113
      %p115 = scmp.ne.s32.totalorder %s103, %s104
      %p116 = scmp.eq.s32.totalorder %s26, 1
      %p117 = por %p115, %p116
      %p119 = scmp.ne.s32.totalorder %s104, %s118
      %p120 = scmp.eq.s32.totalorder %s26, 0
      %p121 = por %p119, %p120
      %s123 = sadd.s32 %s122, 1
      %p126 = scmp.eq.s32.totalorder %s20, 1
      %p127 = scmp.ne.s32.totalorder %s122, %s124
      %p128 = scmp.eq.s32.totalorder %s20, 0
      %p129 = por %p127, %p128
      %p130 = scmp.ne.s32.totalorder %s122, %s124
      %p131 = scmp.eq.s32.totalorder %s25, 1
      %p132 = por %p130, %p131
      %p133 = scmp.ne.s32.totalorder %s124, %s125
      %p134 = scmp.eq.s32.totalorder %s25, 0
      %p135 = por %p133, %p134
      %p136 = scmp.ne.s32.totalorder %s124, %s125
      %p137 = scmp.eq.s32.totalorder %s26, 1
      %p138 = por %p136, %p137
      %p140 = scmp.ne.s32.totalorder %s125, %s139
      %p141 = scmp.eq.s32.totalorder %s26, 0
      %p142 = por %p140, %p141
      %s143 = ssub.s32 %s20, %s27
      %p144 = scmp.eq.s32.totalorder %s143, 0
      %s146 = sadd.s32 %s145, 1
      %s147 = scalar_select %p144, %s145, %s146
      %p150 = pneg %p144
      %p151 = scmp.eq.s32.totalorder %s20, 1
      %p152 = por %p150, %p151
      %p153 = scmp.ne.s32.totalorder %s145, %s148
      %p154 = scmp.eq.s32.totalorder %s20, 0
      %p155 = por %p153, %p154
      %p156 = scmp.ne.s32.totalorder %s145, %s148
      %p157 = scmp.eq.s32.totalorder %s25, 1
      %p158 = por %p156, %p157
      %p159 = scmp.ne.s32.totalorder %s148, %s149
      %p160 = scmp.eq.s32.totalorder %s25, 0
      %p161 = por %p159, %p160
      %p162 = scmp.ne.s32.totalorder %s148, %s149
      %p163 = scmp.eq.s32.totalorder %s26, 1
      %p164 = por %p162, %p163
      %p166 = scmp.ne.s32.totalorder %s149, %s165
      %p167 = scmp.eq.s32.totalorder %s26, 0
      %p168 = por %p166, %p167
      %p169 = scmp.le.s32.totalorder 1, %s20
      %p170 = scmp.lt.s32.totalorder %s20, 3
      %p171 = pnand %p169, %p170
      %p172 = pneg %p171
      // Predicated region
      $region9: #{tpu_custom_call.1} parent=5 // pred_check
        _
      $region10: #{tpu_custom_call.1} parent=5 // pred_check_branch
        %174 = sbr.rel (%p171) target = $region12
      $region11: #{tpu_custom_call.1} parent=5 // pred_region
        %s175 = ssub.s32 %s20, 1
        // Predicated region
        $region13: #{tpu_custom_call.1} parent=11 // pred_check
          %p176 = pneg %p93
        $region14: #{tpu_custom_call.1} parent=11 // pred_check_branch
          %178 = sbr.rel (%p176) target = $region16
        $region15: #{tpu_custom_call.1} parent=11 // pred_region
          _
        $region16: #{tpu_custom_call.1} parent=11 // pred_fallthru
          _
        // Predicated region
        $region17: #{tpu_custom_call.1} parent=11 // pred_check
          %p179 = pneg %p114
        $region18: #{tpu_custom_call.1} parent=11 // pred_check_branch
          %181 = sbr.rel (%p179) target = $region20
        $region19: #{tpu_custom_call.1} parent=11 // pred_region
          _
        $region20: #{tpu_custom_call.1} parent=11 // pred_fallthru
          _
        // Predicated region
        $region21: #{tpu_custom_call.1} parent=11 // pred_check
          %p182 = pneg %p135
        $region22: #{tpu_custom_call.1} parent=11 // pred_check_branch
          %184 = sbr.rel (%p182) target = $region24
        $region23: #{tpu_custom_call.1} parent=11 // pred_region
          %s186 = ssub.s32 1792, 1792
          %187 = vsyncadd [#allocation6], %s186
          %s188 = sshll.u32 [#allocation7], 4
          %s189 = int_to_ptr.vmem [resolvable:$true] %s188
          %194 = dma.hbm_to_vmem [thread:$0]  %s4, 1792, %s189, [#allocation6], 256, 256, 16
        $region24: #{tpu_custom_call.1} parent=11 // pred_fallthru
          _
      $region12: #{tpu_custom_call.1} parent=5 // pred_fallthru
        _
      %p195 = scmp.lt.s32.totalorder %s20, 2
      // Predicated region
      $region25: #{tpu_custom_call.1} parent=5 // pred_check
        %p196 = pneg %p195
      $region26: #{tpu_custom_call.1} parent=5 // pred_check_branch
        %198 = sbr.rel (%p196) target = $region28
      $region27: #{tpu_custom_call.1} parent=5 // pred_region
        // Predicated region
        $region29: #{tpu_custom_call.1} parent=27 // pred_check
          %p199 = pneg %p40
        $region30: #{tpu_custom_call.1} parent=27 // pred_check_branch
          %201 = sbr.rel (%p199) target = $region32
        $region31: #{tpu_custom_call.1} parent=27 // pred_region
          %s202 = sand.u32 %s30, 1
          %s203 = scalar_lea.sflag [#allocation3], %s202
          %s204 = sand.u32 %s30, 1
          %s205 = smul.addr %s204, 64
          %s206 = scalar_lea.vmem [#allocation2], %s205
          %s208 = ssub.s32 1024, 1024
          %209 = vsyncadd %s203, %s208
          %s210 = smul.addr %s20, 8
          %s211 = smul.addr %s210, 128
          %s212 = scalar_lea.hbm %s0, %s211
          %s213 = sshll.u32 %s206, 4
          %s214 = int_to_ptr.vmem [resolvable:$true] %s213
          %219 = dma.hbm_to_vmem [thread:$0]  %s212, 1024, %s214, %s203, 256, 256, 16
        $region32: #{tpu_custom_call.1} parent=27 // pred_fallthru
          _
        // Predicated region
        $region33: #{tpu_custom_call.1} parent=27 // pred_check
          %p220 = pneg %p66
        $region34: #{tpu_custom_call.1} parent=27 // pred_check_branch
          %222 = sbr.rel (%p220) target = $region36
        $region35: #{tpu_custom_call.1} parent=27 // pred_region
          %s223 = sand.u32 %s20, 1
          %s224 = scalar_lea.sflag [#allocation6], %s223
          %s225 = sand.u32 %s56, 1
          %s226 = smul.addr %s225, 64
          %s227 = scalar_lea.vmem [#allocation5], %s226
          %s229 = ssub.s32 1024, 1024
          %230 = vsyncadd %s224, %s229
          %s231 = smul.addr %s20, 8
          %s232 = smul.addr %s231, 128
          %s233 = scalar_lea.hbm %s1, %s232
          %s234 = sshll.u32 %s227, 4
          %s235 = int_to_ptr.vmem [resolvable:$true] %s234
          %240 = dma.hbm_to_vmem [thread:$0]  %s233, 1024, %s235, %s224, 256, 256, 16
        $region36: #{tpu_custom_call.1} parent=27 // pred_fallthru
          _
      $region28: #{tpu_custom_call.1} parent=5 // pred_fallthru
        _
      %p241 = scmp.le.s32.totalorder 1, %s20
      %p242 = scmp.lt.s32.totalorder %s20, 3
      %p243 = pnand %p241, %p242
      %p244 = pneg %p243
      // Predicated region
      $region37: #{tpu_custom_call.1} parent=5 // pred_check
        _
      $region38: #{tpu_custom_call.1} parent=5 // pred_check_branch
        %246 = sbr.rel (%p243) target = $region40
      $region39: #{tpu_custom_call.1} parent=5 // pred_region
        %s247 = ssub.s32 %s20, 1
        %s248 = sand.u32 %s33, 1
        %s249 = scalar_lea.sflag [#allocation3], %s248
        %s250 = sand.u32 %s33, 1
        %s251 = smul.addr %s250, 64
        %s252 = scalar_lea.vmem [#allocation2], %s251
        // Predicated region
        $region41: #{tpu_custom_call.1} parent=39 // pred_check
          %p253 = pneg %p46
        $region42: #{tpu_custom_call.1} parent=39 // pred_check_branch
          %255 = sbr.rel (%p253) target = $region44
        $region43: #{tpu_custom_call.1} parent=39 // pred_region
          %256 = dma.done %s249, 1024
        $region44: #{tpu_custom_call.1} parent=39 // pred_fallthru
          _
        %s257 = sand.u32 %s25, 1
        %s258 = scalar_lea.sflag [#allocation6], %s257
        %s259 = sand.u32 %s59, 1
        %s260 = smul.addr %s259, 64
        %s261 = scalar_lea.vmem [#allocation5], %s260
        // Predicated region
        $region45: #{tpu_custom_call.1} parent=39 // pred_check
          %p262 = pneg %p72
        $region46: #{tpu_custom_call.1} parent=39 // pred_check_branch
          %264 = sbr.rel (%p262) target = $region48
        $region47: #{tpu_custom_call.1} parent=39 // pred_region
          %265 = dma.done %s258, 1024
        $region48: #{tpu_custom_call.1} parent=39 // pred_fallthru
          _
        // Predicated region
        $region49: #{tpu_custom_call.1} parent=39 // pred_check
          %p266 = pneg %p135
        $region50: #{tpu_custom_call.1} parent=39 // pred_check_branch
          %268 = sbr.rel (%p266) target = $region52
        $region51: #{tpu_custom_call.1} parent=39 // pred_region
          %269 = dma.done [#allocation6], 1792
        $region52: #{tpu_custom_call.1} parent=39 // pred_fallthru
          _
        %s270 = sand.u32 %s33, 1
        %s271 = scalar_lea.sflag [#allocation3], %s270
        %s272 = sand.u32 %s33, 1
        %s273 = smul.addr %s272, 64
        %s274 = scalar_lea.vmem [#allocation2], %s273
        %p275 = pneg %p46
        %p276 = pneg %p43
        %s277 = sand.u32 %s25, 1
        %s278 = scalar_lea.sflag [#allocation6], %s277
        %s279 = sand.u32 %s59, 1
        %s280 = smul.addr %s279, 64
        %s281 = scalar_lea.vmem [#allocation5], %s280
        %p282 = pneg %p72
        %p283 = pneg %p69
        %p284 = pneg %p93
        %p285 = pneg %p90
        %p286 = pneg %p114
        %p287 = pneg %p111
        %p288 = pneg %p135
        %p289 = pneg %p132
        %p290 = pneg %p161
        %p291 = pneg %p158
        %s292 = sand.u32 %s148, 1
        %s293 = scalar_lea.sflag [#allocation4], %s292
        %s294 = sand.u32 %s148, 1
        %s295 = smul.addr %s294, 64
        %s296 = scalar_lea.vmem [#allocation8], %s295
        %v297 = vld [vmem:[%s252] sm:$0xff]
        %v298 = vld [vmem:[%s252 + $0x8] sm:$0xff]
        %v299 = vld [vmem:[%s252 + $0x10] sm:$0xff]
        %v300 = vld [vmem:[%s252 + $0x18] sm:$0xff]
        %v301 = vld [vmem:[%s252 + $0x20] sm:$0xff]
        %v302 = vld [vmem:[%s252 + $0x28] sm:$0xff]
        %v303 = vld [vmem:[%s252 + $0x30] sm:$0xff]
        %v304 = vld [vmem:[%s252 + $0x38] sm:$0xff]
        %v305 = vld [vmem:[%s261] sm:$0xff]
        %v306 = vld [vmem:[%s261 + $0x8] sm:$0xff]
        %v307 = vld [vmem:[%s261 + $0x10] sm:$0xff]
        %v308 = vld [vmem:[%s261 + $0x18] sm:$0xff]
        %v309 = vld [vmem:[%s261 + $0x20] sm:$0xff]
        %v310 = vld [vmem:[%s261 + $0x28] sm:$0xff]
        %v311 = vld [vmem:[%s261 + $0x30] sm:$0xff]
        %v312 = vld [vmem:[%s261 + $0x38] sm:$0xff]
        %v313 = vmul.f32 %v297, %v305
        %v314 = vmul.f32 %v298, %v306
        %v315 = vmul.f32 %v299, %v307
        %v316 = vmul.f32 %v300, %v308
        %v317 = vmul.f32 %v301, %v309
        %v318 = vmul.f32 %v302, %v310
        %v319 = vmul.f32 %v303, %v311
        %v320 = vmul.f32 %v304, %v312
        %v321 = vmax.f32 %v313, %v317
        %v322 = vmax.f32 %v315, %v319
        %v323 = vmax.f32 %v321, %v322
        %v324 = vrot.slane %v323, 4
        %v325 = vmax.f32 %v323, %v324
        %v326 = vrot.slane %v325, 2
        %v327 = vmax.f32 %v325, %v326
        %v328 = vrot.slane %v327, 1
        %v329 = vmax.f32 %v327, %v328
        %v330 = vmax.f32 %v314, %v318
        %v331 = vmax.f32 %v316, %v320
        %v332 = vmax.f32 %v330, %v331
        %v333 = vrot.slane %v332, 4
        %v334 = vmax.f32 %v332, %v333
        %v335 = vrot.slane %v334, 2
        %v336 = vmax.f32 %v334, %v335
        %v337 = vrot.slane %v336, 1
        %v338 = vmax.f32 %v336, %v337
        %341 = vrot.lane.b32.xlu0 %v329, 51
        %v342 = vpop.permute.xlu0 %341
        %343 = vrot.lane.b32.xlu0 %v338, 51
        %v344 = vpop.permute.xlu0 %343
        %vm345 = vcmask 416768
        %v346 = vsel %vm345, %v342, %v344
        %v350 = vsel %vm345, 0.0, %v342
        %v351 = vsel %vm345, %v344, 0.0
        %v352 = vld [vmem:[#allocation7] sm:$0xff]
        %v353 = vld [vmem:[#allocation7 + $0x8] sm:$0xff]
        %v354 = vld [vmem:[#allocation7 + $0x10] sm:$0xff]
        %v355 = vld [vmem:[#allocation7 + $0x18] sm:$0xff]
        %v356 = vld [vmem:[#allocation7 + $0x20] sm:$0xff]
        %v357 = vld [vmem:[#allocation7 + $0x28] sm:$0xff]
        %v358 = vld [vmem:[#allocation7 + $0x30] sm:$0xff]
        %v359 = vld [vmem:[#allocation7 + $0x38] sm:$0xff]
        %v360 = vld [vmem:[#allocation7 + $0x40] sm:$0xff]
        %v361 = vld [vmem:[#allocation7 + $0x48] sm:$0xff]
        %v362 = vld [vmem:[#allocation7 + $0x50] sm:$0xff]
        %v363 = vld [vmem:[#allocation7 + $0x58] sm:$0xff]
        %v364 = vld [vmem:[#allocation7 + $0x60] sm:$0x1]
        %v365 = vld [vmem:[#allocation7 + $0x68] sm:$0x1]
        %v366 = vmul.f32 %v350, %v352
        %v367 = vmul.f32 %v346, %v353
        %v370 = vrot.slane %v352, 1
        %v371 = vrot.slane %v353, 1
        %372 = vrot.lane.b32.xlu0 %v370, 1
        %v373 = vpop.permute.xlu0 %372
        %374 = vrot.lane.b32.xlu0 %v371, 1
        %v375 = vpop.permute.xlu0 %374
        %vm376 = vcmask 7168
        %v377 = vsel %vm376, %v373, %v375
        %v381 = vmul.f32 %v350, %v373
        %v382 = vmul.f32 %v346, %v377
        %v383 = vmul.f32 %v351, %v375
        %387 = vrot.lane.b32.xlu0 %v381, 127
        %v388 = vpop.permute.xlu0 %387
        %389 = vrot.lane.b32.xlu0 %v382, 127
        %v390 = vpop.permute.xlu0 %389
        %391 = vrot.lane.b32.xlu0 %v383, 127
        %v392 = vpop.permute.xlu0 %391
        %vm393 = vcmask 1039360
        %v394 = vsel %vm393, %v388, %v390
        %v395 = vsel %vm393, %v390, %v392
        %v398 = vadd.f32 %v366, %v394
        %v399 = vadd.f32 %v367, %v395
        %v400 = vrot.slane %v352, 2
        %v401 = vrot.slane %v353, 2
        %402 = vrot.lane.b32.xlu0 %v400, 2
        %v403 = vpop.permute.xlu0 %402
        %404 = vrot.lane.b32.xlu0 %v401, 2
        %v405 = vpop.permute.xlu0 %404
        %vm406 = vcmask 15360
        %v407 = vsel %vm406, %v403, %v405
        %v411 = vmul.f32 %v350, %v403
        %v412 = vmul.f32 %v346, %v407
        %v413 = vmul.f32 %v351, %v405
        %417 = vrot.lane.b32.xlu0 %v411, 126
        %v418 = vpop.permute.xlu0 %417
        %419 = vrot.lane.b32.xlu0 %v412, 126
        %v420 = vpop.permute.xlu0 %419
        %421 = vrot.lane.b32.xlu0 %v413, 126
        %v422 = vpop.permute.xlu0 %421
        %vm423 = vcmask 1031168
        %v424 = vsel %vm423, %v418, %v420
        %v425 = vsel %vm423, %v420, %v422
        %v428 = vadd.f32 %v398, %v424
        %v429 = vadd.f32 %v399, %v425
        %v430 = vrot.slane %v352, 3
        %v431 = vrot.slane %v353, 3
        %432 = vrot.lane.b32.xlu0 %v430, 3
        %v433 = vpop.permute.xlu0 %432
        %434 = vrot.lane.b32.xlu0 %v431, 3
        %v435 = vpop.permute.xlu0 %434
        %vm436 = vcmask 23552
        %v437 = vsel %vm436, %v433, %v435
        %v441 = vmul.f32 %v350, %v433
        %v442 = vmul.f32 %v346, %v437
        %v443 = vmul.f32 %v351, %v435
        %447 = vrot.lane.b32.xlu0 %v441, 125
        %v448 = vpop.permute.xlu0 %447
        %449 = vrot.lane.b32.xlu0 %v442, 125
        %v450 = vpop.permute.xlu0 %449
        %451 = vrot.lane.b32.xlu0 %v443, 125
        %v452 = vpop.permute.xlu0 %451
        %vm453 = vcmask 1022976
        %v454 = vsel %vm453, %v448, %v450
        %v455 = vsel %vm453, %v450, %v452
        %v458 = vadd.f32 %v428, %v454
        %v459 = vadd.f32 %v429, %v455
        %v460 = vrot.slane %v352, 4
        %v461 = vrot.slane %v353, 4
        %462 = vrot.lane.b32.xlu0 %v460, 4
        %v463 = vpop.permute.xlu0 %462
        %464 = vrot.lane.b32.xlu0 %v461, 4
        %v465 = vpop.permute.xlu0 %464
        %vm466 = vcmask 31744
        %v467 = vsel %vm466, %v463, %v465
        %v471 = vmul.f32 %v350, %v463
        %v472 = vmul.f32 %v346, %v467
        %v473 = vmul.f32 %v351, %v465
        %477 = vrot.lane.b32.xlu0 %v471, 124
        %v478 = vpop.permute.xlu0 %477
        %479 = vrot.lane.b32.xlu0 %v472, 124
        %v480 = vpop.permute.xlu0 %479
        %481 = vrot.lane.b32.xlu0 %v473, 124
        %v482 = vpop.permute.xlu0 %481
        %vm483 = vcmask 1014784
        %v484 = vsel %vm483, %v478, %v480
        %v485 = vsel %vm483, %v480, %v482
        %v488 = vadd.f32 %v458, %v484
        %v489 = vadd.f32 %v459, %v485
        %v490 = vrot.slane %v352, 5
        %v491 = vrot.slane %v353, 5
        %492 = vrot.lane.b32.xlu0 %v490, 5
        %v493 = vpop.permute.xlu0 %492
        %494 = vrot.lane.b32.xlu0 %v491, 5
        %v495 = vpop.permute.xlu0 %494
        %vm496 = vcmask 39936
        %v497 = vsel %vm496, %v493, %v495
        %v501 = vmul.f32 %v350, %v493
        %v502 = vmul.f32 %v346, %v497
        %v503 = vmul.f32 %v351, %v495
        %507 = vrot.lane.b32.xlu0 %v501, 123
        %v508 = vpop.permute.xlu0 %507
        %509 = vrot.lane.b32.xlu0 %v502, 123
        %v510 = vpop.permute.xlu0 %509
        %511 = vrot.lane.b32.xlu0 %v503, 123
        %v512 = vpop.permute.xlu0 %511
        %vm513 = vcmask 1006592
        %v514 = vsel %vm513, %v508, %v510
        %v515 = vsel %vm513, %v510, %v512
        %v518 = vadd.f32 %v488, %v514
        %v519 = vadd.f32 %v489, %v515
        %v520 = vrot.slane %v352, 6
        %v521 = vrot.slane %v353, 6
        %522 = vrot.lane.b32.xlu0 %v520, 6
        %v523 = vpop.permute.xlu0 %522
        %524 = vrot.lane.b32.xlu0 %v521, 6
        %v525 = vpop.permute.xlu0 %524
        %vm526 = vcmask 48128
        %v527 = vsel %vm526, %v523, %v525
        %v531 = vmul.f32 %v350, %v523
        %v532 = vmul.f32 %v346, %v527
        %v533 = vmul.f32 %v351, %v525
        %537 = vrot.lane.b32.xlu0 %v531, 122
        %v538 = vpop.permute.xlu0 %537
        %539 = vrot.lane.b32.xlu0 %v532, 122
        %v540 = vpop.permute.xlu0 %539
        %541 = vrot.lane.b32.xlu0 %v533, 122
        %v542 = vpop.permute.xlu0 %541
        %vm543 = vcmask 998400
        %v544 = vsel %vm543, %v538, %v540
        %v545 = vsel %vm543, %v540, %v542
        %v548 = vadd.f32 %v518, %v544
        %v549 = vadd.f32 %v519, %v545
        %v550 = vrot.slane %v352, 7
        %v551 = vrot.slane %v353, 7
        %552 = vrot.lane.b32.xlu0 %v550, 16
        %v553 = vpop.permute.xlu0 %552
        %554 = vrot.lane.b32.xlu0 %v551, 16
        %v555 = vpop.permute.xlu0 %554
        %vm556 = vcmask 130048
        %v557 = vsel %vm556, %v553, %v555
        %v561 = vmul.f32 %v350, %v553
        %v562 = vmul.f32 %v346, %v557
        %v563 = vmul.f32 %v351, %v555
        %567 = vrot.lane.b32.xlu0 %v561, 112
        %v568 = vpop.permute.xlu0 %567
        %569 = vrot.lane.b32.xlu0 %v562, 112
        %v570 = vpop.permute.xlu0 %569
        %571 = vrot.lane.b32.xlu0 %v563, 112
        %v572 = vpop.permute.xlu0 %571
        %vm573 = vcmask 916480
        %v574 = vsel %vm573, %v568, %v570
        %v575 = vsel %vm573, %v570, %v572
        %v578 = vadd.f32 %v548, %v574
        %v579 = vadd.f32 %v549, %v575
        %582 = vrot.lane.b32.xlu0 %v354, 17
        %v583 = vpop.permute.xlu0 %582
        %584 = vrot.lane.b32.xlu0 %v355, 17
        %v585 = vpop.permute.xlu0 %584
        %vm586 = vcmask 138240
        %v587 = vsel %vm586, %v583, %v585
        %v591 = vmul.f32 %v350, %v583
        %v592 = vmul.f32 %v346, %v587
        %v593 = vmul.f32 %v351, %v585
        %597 = vrot.lane.b32.xlu0 %v591, 111
        %v598 = vpop.permute.xlu0 %597
        %599 = vrot.lane.b32.xlu0 %v592, 111
        %v600 = vpop.permute.xlu0 %599
        %601 = vrot.lane.b32.xlu0 %v593, 111
        %v602 = vpop.permute.xlu0 %601
        %vm603 = vcmask 908288
        %v604 = vsel %vm603, %v598, %v600
        %v605 = vsel %vm603, %v600, %v602
        %v608 = vadd.f32 %v578, %v604
        %v609 = vadd.f32 %v579, %v605
        %v610 = vrot.slane %v354, 1
        %v611 = vrot.slane %v355, 1
        %612 = vrot.lane.b32.xlu0 %v610, 18
        %v613 = vpop.permute.xlu0 %612
        %614 = vrot.lane.b32.xlu0 %v611, 18
        %v615 = vpop.permute.xlu0 %614
        %vm616 = vcmask 146432
        %v617 = vsel %vm616, %v613, %v615
        %v621 = vmul.f32 %v350, %v613
        %v622 = vmul.f32 %v346, %v617
        %v623 = vmul.f32 %v351, %v615
        %627 = vrot.lane.b32.xlu0 %v621, 110
        %v628 = vpop.permute.xlu0 %627
        %629 = vrot.lane.b32.xlu0 %v622, 110
        %v630 = vpop.permute.xlu0 %629
        %631 = vrot.lane.b32.xlu0 %v623, 110
        %v632 = vpop.permute.xlu0 %631
        %vm633 = vcmask 900096
        %v634 = vsel %vm633, %v628, %v630
        %v635 = vsel %vm633, %v630, %v632
        %v638 = vadd.f32 %v608, %v634
        %v639 = vadd.f32 %v609, %v635
        %v640 = vrot.slane %v354, 2
        %v641 = vrot.slane %v355, 2
        %642 = vrot.lane.b32.xlu0 %v640, 19
        %v643 = vpop.permute.xlu0 %642
        %644 = vrot.lane.b32.xlu0 %v641, 19
        %v645 = vpop.permute.xlu0 %644
        %vm646 = vcmask 154624
        %v647 = vsel %vm646, %v643, %v645
        %v651 = vmul.f32 %v350, %v643
        %v652 = vmul.f32 %v346, %v647
        %v653 = vmul.f32 %v351, %v645
        %657 = vrot.lane.b32.xlu0 %v651, 109
        %v658 = vpop.permute.xlu0 %657
        %659 = vrot.lane.b32.xlu0 %v652, 109
        %v660 = vpop.permute.xlu0 %659
        %661 = vrot.lane.b32.xlu0 %v653, 109
        %v662 = vpop.permute.xlu0 %661
        %vm663 = vcmask 891904
        %v664 = vsel %vm663, %v658, %v660
        %v665 = vsel %vm663, %v660, %v662
        %v668 = vadd.f32 %v638, %v664
        %v669 = vadd.f32 %v639, %v665
        %v670 = vrot.slane %v354, 3
        %v671 = vrot.slane %v355, 3
        %672 = vrot.lane.b32.xlu0 %v670, 20
        %v673 = vpop.permute.xlu0 %672
        %674 = vrot.lane.b32.xlu0 %v671, 20
        %v675 = vpop.permute.xlu0 %674
        %vm676 = vcmask 162816
        %v677 = vsel %vm676, %v673, %v675
        %v681 = vmul.f32 %v350, %v673
        %v682 = vmul.f32 %v346, %v677
        %v683 = vmul.f32 %v351, %v675
        %687 = vrot.lane.b32.xlu0 %v681, 108
        %v688 = vpop.permute.xlu0 %687
        %689 = vrot.lane.b32.xlu0 %v682, 108
        %v690 = vpop.permute.xlu0 %689
        %691 = vrot.lane.b32.xlu0 %v683, 108
        %v692 = vpop.permute.xlu0 %691
        %vm693 = vcmask 883712
        %v694 = vsel %vm693, %v688, %v690
        %v695 = vsel %vm693, %v690, %v692
        %v698 = vadd.f32 %v668, %v694
        %v699 = vadd.f32 %v669, %v695
        %v700 = vrot.slane %v354, 4
        %v701 = vrot.slane %v355, 4
        %702 = vrot.lane.b32.xlu0 %v700, 21
        %v703 = vpop.permute.xlu0 %702
        %704 = vrot.lane.b32.xlu0 %v701, 21
        %v705 = vpop.permute.xlu0 %704
        %vm706 = vcmask 171008
        %v707 = vsel %vm706, %v703, %v705
        %v711 = vmul.f32 %v350, %v703
        %v712 = vmul.f32 %v346, %v707
        %v713 = vmul.f32 %v351, %v705
        %717 = vrot.lane.b32.xlu0 %v711, 107
        %v718 = vpop.permute.xlu0 %717
        %719 = vrot.lane.b32.xlu0 %v712, 107
        %v720 = vpop.permute.xlu0 %719
        %721 = vrot.lane.b32.xlu0 %v713, 107
        %v722 = vpop.permute.xlu0 %721
        %vm723 = vcmask 875520
        %v724 = vsel %vm723, %v718, %v720
        %v725 = vsel %vm723, %v720, %v722
        %v728 = vadd.f32 %v698, %v724
        %v729 = vadd.f32 %v699, %v725
        %v730 = vrot.slane %v354, 5
        %v731 = vrot.slane %v355, 5
        %732 = vrot.lane.b32.xlu0 %v730, 22
        %v733 = vpop.permute.xlu0 %732
        %734 = vrot.lane.b32.xlu0 %v731, 22
        %v735 = vpop.permute.xlu0 %734
        %vm736 = vcmask 179200
        %v737 = vsel %vm736, %v733, %v735
        %v741 = vmul.f32 %v350, %v733
        %v742 = vmul.f32 %v346, %v737
        %v743 = vmul.f32 %v351, %v735
        %747 = vrot.lane.b32.xlu0 %v741, 106
        %v748 = vpop.permute.xlu0 %747
        %749 = vrot.lane.b32.xlu0 %v742, 106
        %v750 = vpop.permute.xlu0 %749
        %751 = vrot.lane.b32.xlu0 %v743, 106
        %v752 = vpop.permute.xlu0 %751
        %vm753 = vcmask 867328
        %v754 = vsel %vm753, %v748, %v750
        %v755 = vsel %vm753, %v750, %v752
        %v758 = vadd.f32 %v728, %v754
        %v759 = vadd.f32 %v729, %v755
        %v760 = vrot.slane %v354, 6
        %v761 = vrot.slane %v355, 6
        %762 = vrot.lane.b32.xlu0 %v760, 32
        %v763 = vpop.permute.xlu0 %762
        %764 = vrot.lane.b32.xlu0 %v761, 32
        %v765 = vpop.permute.xlu0 %764
        %vm766 = vcmask 261120
        %v767 = vsel %vm766, %v763, %v765
        %v771 = vmul.f32 %v350, %v763
        %v772 = vmul.f32 %v346, %v767
        %v773 = vmul.f32 %v351, %v765
        %777 = vrot.lane.b32.xlu0 %v771, 96
        %v778 = vpop.permute.xlu0 %777
        %779 = vrot.lane.b32.xlu0 %v772, 96
        %v780 = vpop.permute.xlu0 %779
        %781 = vrot.lane.b32.xlu0 %v773, 96
        %v782 = vpop.permute.xlu0 %781
        %vm783 = vcmask 785408
        %v784 = vsel %vm783, %v778, %v780
        %v785 = vsel %vm783, %v780, %v782
        %v788 = vadd.f32 %v758, %v784
        %v789 = vadd.f32 %v759, %v785
        %v790 = vrot.slane %v354, 7
        %v791 = vrot.slane %v355, 7
        %792 = vrot.lane.b32.xlu0 %v790, 33
        %v793 = vpop.permute.xlu0 %792
        %794 = vrot.lane.b32.xlu0 %v791, 33
        %v795 = vpop.permute.xlu0 %794
        %vm796 = vcmask 269312
        %v797 = vsel %vm796, %v793, %v795
        %v801 = vmul.f32 %v350, %v793
        %v802 = vmul.f32 %v346, %v797
        %v803 = vmul.f32 %v351, %v795
        %807 = vrot.lane.b32.xlu0 %v801, 95
        %v808 = vpop.permute.xlu0 %807
        %809 = vrot.lane.b32.xlu0 %v802, 95
        %v810 = vpop.permute.xlu0 %809
        %811 = vrot.lane.b32.xlu0 %v803, 95
        %v812 = vpop.permute.xlu0 %811
        %vm813 = vcmask 777216
        %v814 = vsel %vm813, %v808, %v810
        %v815 = vsel %vm813, %v810, %v812
        %v818 = vadd.f32 %v788, %v814
        %v819 = vadd.f32 %v789, %v815
        %822 = vrot.lane.b32.xlu0 %v356, 34
        %v823 = vpop.permute.xlu0 %822
        %824 = vrot.lane.b32.xlu0 %v357, 34
        %v825 = vpop.permute.xlu0 %824
        %vm826 = vcmask 277504
        %v827 = vsel %vm826, %v823, %v825
        %v831 = vmul.f32 %v350, %v823
        %v832 = vmul.f32 %v346, %v827
        %v833 = vmul.f32 %v351, %v825
        %837 = vrot.lane.b32.xlu0 %v831, 94
        %v838 = vpop.permute.xlu0 %837
        %839 = vrot.lane.b32.xlu0 %v832, 94
        %v840 = vpop.permute.xlu0 %839
        %841 = vrot.lane.b32.xlu0 %v833, 94
        %v842 = vpop.permute.xlu0 %841
        %vm843 = vcmask 769024
        %v844 = vsel %vm843, %v838, %v840
        %v845 = vsel %vm843, %v840, %v842
        %v848 = vadd.f32 %v818, %v844
        %v849 = vadd.f32 %v819, %v845
        %v850 = vrot.slane %v356, 1
        %v851 = vrot.slane %v357, 1
        %852 = vrot.lane.b32.xlu0 %v850, 35
        %v853 = vpop.permute.xlu0 %852
        %854 = vrot.lane.b32.xlu0 %v851, 35
        %v855 = vpop.permute.xlu0 %854
        %vm856 = vcmask 285696
        %v857 = vsel %vm856, %v853, %v855
        %v861 = vmul.f32 %v350, %v853
        %v862 = vmul.f32 %v346, %v857
        %v863 = vmul.f32 %v351, %v855
        %867 = vrot.lane.b32.xlu0 %v861, 93
        %v868 = vpop.permute.xlu0 %867
        %869 = vrot.lane.b32.xlu0 %v862, 93
        %v870 = vpop.permute.xlu0 %869
        %871 = vrot.lane.b32.xlu0 %v863, 93
        %v872 = vpop.permute.xlu0 %871
        %vm873 = vcmask 760832
        %v874 = vsel %vm873, %v868, %v870
        %v875 = vsel %vm873, %v870, %v872
        %v878 = vadd.f32 %v848, %v874
        %v879 = vadd.f32 %v849, %v875
        %v880 = vrot.slane %v356, 2
        %v881 = vrot.slane %v357, 2
        %882 = vrot.lane.b32.xlu0 %v880, 36
        %v883 = vpop.permute.xlu0 %882
        %884 = vrot.lane.b32.xlu0 %v881, 36
        %v885 = vpop.permute.xlu0 %884
        %vm886 = vcmask 293888
        %v887 = vsel %vm886, %v883, %v885
        %v891 = vmul.f32 %v350, %v883
        %v892 = vmul.f32 %v346, %v887
        %v893 = vmul.f32 %v351, %v885
        %897 = vrot.lane.b32.xlu0 %v891, 92
        %v898 = vpop.permute.xlu0 %897
        %899 = vrot.lane.b32.xlu0 %v892, 92
        %v900 = vpop.permute.xlu0 %899
        %901 = vrot.lane.b32.xlu0 %v893, 92
        %v902 = vpop.permute.xlu0 %901
        %vm903 = vcmask 752640
        %v904 = vsel %vm903, %v898, %v900
        %v905 = vsel %vm903, %v900, %v902
        %v908 = vadd.f32 %v878, %v904
        %v909 = vadd.f32 %v879, %v905
        %v910 = vrot.slane %v356, 3
        %v911 = vrot.slane %v357, 3
        %912 = vrot.lane.b32.xlu0 %v910, 37
        %v913 = vpop.permute.xlu0 %912
        %914 = vrot.lane.b32.xlu0 %v911, 37
        %v915 = vpop.permute.xlu0 %914
        %vm916 = vcmask 302080
        %v917 = vsel %vm916, %v913, %v915
        %v921 = vmul.f32 %v350, %v913
        %v922 = vmul.f32 %v346, %v917
        %v923 = vmul.f32 %v351, %v915
        %927 = vrot.lane.b32.xlu0 %v921, 91
        %v928 = vpop.permute.xlu0 %927
        %929 = vrot.lane.b32.xlu0 %v922, 91
        %v930 = vpop.permute.xlu0 %929
        %931 = vrot.lane.b32.xlu0 %v923, 91
        %v932 = vpop.permute.xlu0 %931
        %vm933 = vcmask 744448
        %v934 = vsel %vm933, %v928, %v930
        %v935 = vsel %vm933, %v930, %v932
        %v938 = vadd.f32 %v908, %v934
        %v939 = vadd.f32 %v909, %v935
        %v940 = vrot.slane %v356, 4
        %v941 = vrot.slane %v357, 4
        %942 = vrot.lane.b32.xlu0 %v940, 38
        %v943 = vpop.permute.xlu0 %942
        %944 = vrot.lane.b32.xlu0 %v941, 38
        %v945 = vpop.permute.xlu0 %944
        %vm946 = vcmask 310272
        %v947 = vsel %vm946, %v943, %v945
        %v951 = vmul.f32 %v350, %v943
        %v952 = vmul.f32 %v346, %v947
        %v953 = vmul.f32 %v351, %v945
        %957 = vrot.lane.b32.xlu0 %v951, 90
        %v958 = vpop.permute.xlu0 %957
        %959 = vrot.lane.b32.xlu0 %v952, 90
        %v960 = vpop.permute.xlu0 %959
        %961 = vrot.lane.b32.xlu0 %v953, 90
        %v962 = vpop.permute.xlu0 %961
        %vm963 = vcmask 736256
        %v964 = vsel %vm963, %v958, %v960
        %v965 = vsel %vm963, %v960, %v962
        %v968 = vadd.f32 %v938, %v964
        %v969 = vadd.f32 %v939, %v965
        %v970 = vrot.slane %v356, 5
        %v971 = vrot.slane %v357, 5
        %972 = vrot.lane.b32.xlu0 %v970, 48
        %v973 = vpop.permute.xlu0 %972
        %974 = vrot.lane.b32.xlu0 %v971, 48
        %v975 = vpop.permute.xlu0 %974
        %vm976 = vcmask 392192
        %v977 = vsel %vm976, %v973, %v975
        %v981 = vmul.f32 %v350, %v973
        %v982 = vmul.f32 %v346, %v977
        %v983 = vmul.f32 %v351, %v975
        %987 = vrot.lane.b32.xlu0 %v981, 80
        %v988 = vpop.permute.xlu0 %987
        %989 = vrot.lane.b32.xlu0 %v982, 80
        %v990 = vpop.permute.xlu0 %989
        %991 = vrot.lane.b32.xlu0 %v983, 80
        %v992 = vpop.permute.xlu0 %991
        %vm993 = vcmask 654336
        %v994 = vsel %vm993, %v988, %v990
        %v995 = vsel %vm993, %v990, %v992
        %v998 = vadd.f32 %v968, %v994
        %v999 = vadd.f32 %v969, %v995
        %v1000 = vrot.slane %v356, 6
        %v1001 = vrot.slane %v357, 6
        %1002 = vrot.lane.b32.xlu0 %v1000, 49
        %v1003 = vpop.permute.xlu0 %1002
        %1004 = vrot.lane.b32.xlu0 %v1001, 49
        %v1005 = vpop.permute.xlu0 %1004
        %vm1006 = vcmask 400384
        %v1007 = vsel %vm1006, %v1003, %v1005
        %v1011 = vmul.f32 %v350, %v1003
        %v1012 = vmul.f32 %v346, %v1007
        %v1013 = vmul.f32 %v351, %v1005
        %1017 = vrot.lane.b32.xlu0 %v1011, 79
        %v1018 = vpop.permute.xlu0 %1017
        %1019 = vrot.lane.b32.xlu0 %v1012, 79
        %v1020 = vpop.permute.xlu0 %1019
        %1021 = vrot.lane.b32.xlu0 %v1013, 79
        %v1022 = vpop.permute.xlu0 %1021
        %vm1023 = vcmask 646144
        %v1024 = vsel %vm1023, %v1018, %v1020
        %v1025 = vsel %vm1023, %v1020, %v1022
        %v1028 = vadd.f32 %v998, %v1024
        %v1029 = vadd.f32 %v999, %v1025
        %v1030 = vrot.slane %v356, 7
        %v1031 = vrot.slane %v357, 7
        %1032 = vrot.lane.b32.xlu0 %v1030, 50
        %v1033 = vpop.permute.xlu0 %1032
        %1034 = vrot.lane.b32.xlu0 %v1031, 50
        %v1035 = vpop.permute.xlu0 %1034
        %vm1036 = vcmask 408576
        %v1037 = vsel %vm1036, %v1033, %v1035
        %v1041 = vmul.f32 %v350, %v1033
        %v1042 = vmul.f32 %v346, %v1037
        %v1043 = vmul.f32 %v351, %v1035
        %1047 = vrot.lane.b32.xlu0 %v1041, 78
        %v1048 = vpop.permute.xlu0 %1047
        %1049 = vrot.lane.b32.xlu0 %v1042, 78
        %v1050 = vpop.permute.xlu0 %1049
        %1051 = vrot.lane.b32.xlu0 %v1043, 78
        %v1052 = vpop.permute.xlu0 %1051
        %vm1053 = vcmask 637952
        %v1054 = vsel %vm1053, %v1048, %v1050
        %v1055 = vsel %vm1053, %v1050, %v1052
        %v1058 = vadd.f32 %v1028, %v1054
        %v1059 = vadd.f32 %v1029, %v1055
        %1062 = vrot.lane.b32.xlu0 %v358, 51
        %v1063 = vpop.permute.xlu0 %1062
        %1064 = vrot.lane.b32.xlu0 %v359, 51
        %v1065 = vpop.permute.xlu0 %1064
        %v1066 = vsel %vm345, %v1063, %v1065
        %v1070 = vmul.f32 %v350, %v1063
        %v1071 = vmul.f32 %v346, %v1066
        %v1072 = vmul.f32 %v351, %v1065
        %1076 = vrot.lane.b32.xlu0 %v1070, 77
        %v1077 = vpop.permute.xlu0 %1076
        %1078 = vrot.lane.b32.xlu0 %v1071, 77
        %v1079 = vpop.permute.xlu0 %1078
        %1080 = vrot.lane.b32.xlu0 %v1072, 77
        %v1081 = vpop.permute.xlu0 %1080
        %vm1082 = vcmask 629760
        %v1083 = vsel %vm1082, %v1077, %v1079
        %v1084 = vsel %vm1082, %v1079, %v1081
        %v1087 = vadd.f32 %v1058, %v1083
        %v1088 = vadd.f32 %v1059, %v1084
        %v1089 = vrot.slane %v358, 1
        %v1090 = vrot.slane %v359, 1
        %1091 = vrot.lane.b32.xlu0 %v1089, 52
        %v1092 = vpop.permute.xlu0 %1091
        %1093 = vrot.lane.b32.xlu0 %v1090, 52
        %v1094 = vpop.permute.xlu0 %1093
        %vm1095 = vcmask 424960
        %v1096 = vsel %vm1095, %v1092, %v1094
        %v1100 = vmul.f32 %v350, %v1092
        %v1101 = vmul.f32 %v346, %v1096
        %v1102 = vmul.f32 %v351, %v1094
        %1106 = vrot.lane.b32.xlu0 %v1100, 76
        %v1107 = vpop.permute.xlu0 %1106
        %1108 = vrot.lane.b32.xlu0 %v1101, 76
        %v1109 = vpop.permute.xlu0 %1108
        %1110 = vrot.lane.b32.xlu0 %v1102, 76
        %v1111 = vpop.permute.xlu0 %1110
        %vm1112 = vcmask 621568
        %v1113 = vsel %vm1112, %v1107, %v1109
        %v1114 = vsel %vm1112, %v1109, %v1111
        %v1117 = vadd.f32 %v1087, %v1113
        %v1118 = vadd.f32 %v1088, %v1114
        %v1119 = vrot.slane %v358, 2
        %v1120 = vrot.slane %v359, 2
        %1121 = vrot.lane.b32.xlu0 %v1119, 53
        %v1122 = vpop.permute.xlu0 %1121
        %1123 = vrot.lane.b32.xlu0 %v1120, 53
        %v1124 = vpop.permute.xlu0 %1123
        %vm1125 = vcmask 433152
        %v1126 = vsel %vm1125, %v1122, %v1124
        %v1130 = vmul.f32 %v350, %v1122
        %v1131 = vmul.f32 %v346, %v1126
        %v1132 = vmul.f32 %v351, %v1124
        %1136 = vrot.lane.b32.xlu0 %v1130, 75
        %v1137 = vpop.permute.xlu0 %1136
        %1138 = vrot.lane.b32.xlu0 %v1131, 75
        %v1139 = vpop.permute.xlu0 %1138
        %1140 = vrot.lane.b32.xlu0 %v1132, 75
        %v1141 = vpop.permute.xlu0 %1140
        %vm1142 = vcmask 613376
        %v1143 = vsel %vm1142, %v1137, %v1139
        %v1144 = vsel %vm1142, %v1139, %v1141
        %v1147 = vadd.f32 %v1117, %v1143
        %v1148 = vadd.f32 %v1118, %v1144
        %v1149 = vrot.slane %v358, 3
        %v1150 = vrot.slane %v359, 3
        %1151 = vrot.lane.b32.xlu0 %v1149, 54
        %v1152 = vpop.permute.xlu0 %1151
        %1153 = vrot.lane.b32.xlu0 %v1150, 54
        %v1154 = vpop.permute.xlu0 %1153
        %vm1155 = vcmask 441344
        %v1156 = vsel %vm1155, %v1152, %v1154
        %v1160 = vmul.f32 %v350, %v1152
        %v1161 = vmul.f32 %v346, %v1156
        %v1162 = vmul.f32 %v351, %v1154
        %1166 = vrot.lane.b32.xlu0 %v1160, 74
        %v1167 = vpop.permute.xlu0 %1166
        %1168 = vrot.lane.b32.xlu0 %v1161, 74
        %v1169 = vpop.permute.xlu0 %1168
        %1170 = vrot.lane.b32.xlu0 %v1162, 74
        %v1171 = vpop.permute.xlu0 %1170
        %vm1172 = vcmask 605184
        %v1173 = vsel %vm1172, %v1167, %v1169
        %v1174 = vsel %vm1172, %v1169, %v1171
        %v1177 = vadd.f32 %v1147, %v1173
        %v1178 = vadd.f32 %v1148, %v1174
        %v1179 = vrot.slane %v358, 4
        %v1180 = vrot.slane %v359, 4
        %1181 = vrot.lane.b32.xlu0 %v1179, 64
        %v1182 = vpop.permute.xlu0 %1181
        %1183 = vrot.lane.b32.xlu0 %v1180, 64
        %v1184 = vpop.permute.xlu0 %1183
        %vm1185 = vcmask 523264
        %v1186 = vsel %vm1185, %v1182, %v1184
        %v1190 = vmul.f32 %v350, %v1182
        %v1191 = vmul.f32 %v346, %v1186
        %v1192 = vmul.f32 %v351, %v1184
        %1196 = vrot.lane.b32.xlu0 %v1190, 64
        %v1197 = vpop.permute.xlu0 %1196
        %1198 = vrot.lane.b32.xlu0 %v1191, 64
        %v1199 = vpop.permute.xlu0 %1198
        %1200 = vrot.lane.b32.xlu0 %v1192, 64
        %v1201 = vpop.permute.xlu0 %1200
        %v1202 = vsel %vm1185, %v1197, %v1199
        %v1203 = vsel %vm1185, %v1199, %v1201
        %v1206 = vadd.f32 %v1177, %v1202
        %v1207 = vadd.f32 %v1178, %v1203
        %v1208 = vrot.slane %v358, 5
        %v1209 = vrot.slane %v359, 5
        %1210 = vrot.lane.b32.xlu0 %v1208, 65
        %v1211 = vpop.permute.xlu0 %1210
        %1212 = vrot.lane.b32.xlu0 %v1209, 65
        %v1213 = vpop.permute.xlu0 %1212
        %vm1214 = vcmask 531456
        %v1215 = vsel %vm1214, %v1211, %v1213
        %v1219 = vmul.f32 %v350, %v1211
        %v1220 = vmul.f32 %v346, %v1215
        %v1221 = vmul.f32 %v351, %v1213
        %1225 = vrot.lane.b32.xlu0 %v1219, 63
        %v1226 = vpop.permute.xlu0 %1225
        %1227 = vrot.lane.b32.xlu0 %v1220, 63
        %v1228 = vpop.permute.xlu0 %1227
        %1229 = vrot.lane.b32.xlu0 %v1221, 63
        %v1230 = vpop.permute.xlu0 %1229
        %vm1231 = vcmask 515072
        %v1232 = vsel %vm1231, %v1226, %v1228
        %v1233 = vsel %vm1231, %v1228, %v1230
        %v1236 = vadd.f32 %v1206, %v1232
        %v1237 = vadd.f32 %v1207, %v1233
        %v1238 = vrot.slane %v358, 6
        %v1239 = vrot.slane %v359, 6
        %1240 = vrot.lane.b32.xlu0 %v1238, 66
        %v1241 = vpop.permute.xlu0 %1240
        %1242 = vrot.lane.b32.xlu0 %v1239, 66
        %v1243 = vpop.permute.xlu0 %1242
        %vm1244 = vcmask 539648
        %v1245 = vsel %vm1244, %v1241, %v1243
        %v1249 = vmul.f32 %v350, %v1241
        %v1250 = vmul.f32 %v346, %v1245
        %v1251 = vmul.f32 %v351, %v1243
        %1255 = vrot.lane.b32.xlu0 %v1249, 62
        %v1256 = vpop.permute.xlu0 %1255
        %1257 = vrot.lane.b32.xlu0 %v1250, 62
        %v1258 = vpop.permute.xlu0 %1257
        %1259 = vrot.lane.b32.xlu0 %v1251, 62
        %v1260 = vpop.permute.xlu0 %1259
        %vm1261 = vcmask 506880
        %v1262 = vsel %vm1261, %v1256, %v1258
        %v1263 = vsel %vm1261, %v1258, %v1260
        %v1266 = vadd.f32 %v1236, %v1262
        %v1267 = vadd.f32 %v1237, %v1263
        %v1268 = vrot.slane %v358, 7
        %v1269 = vrot.slane %v359, 7
        %1270 = vrot.lane.b32.xlu0 %v1268, 67
        %v1271 = vpop.permute.xlu0 %1270
        %1272 = vrot.lane.b32.xlu0 %v1269, 67
        %v1273 = vpop.permute.xlu0 %1272
        %vm1274 = vcmask 547840
        %v1275 = vsel %vm1274, %v1271, %v1273
        %v1279 = vmul.f32 %v350, %v1271
        %v1280 = vmul.f32 %v346, %v1275
        %v1281 = vmul.f32 %v351, %v1273
        %1285 = vrot.lane.b32.xlu0 %v1279, 61
        %v1286 = vpop.permute.xlu0 %1285
        %1287 = vrot.lane.b32.xlu0 %v1280, 61
        %v1288 = vpop.permute.xlu0 %1287
        %1289 = vrot.lane.b32.xlu0 %v1281, 61
        %v1290 = vpop.permute.xlu0 %1289
        %vm1291 = vcmask 498688
        %v1292 = vsel %vm1291, %v1286, %v1288
        %v1293 = vsel %vm1291, %v1288, %v1290
        %v1296 = vadd.f32 %v1266, %v1292
        %v1297 = vadd.f32 %v1267, %v1293
        %1300 = vrot.lane.b32.xlu0 %v360, 68
        %v1301 = vpop.permute.xlu0 %1300
        %1302 = vrot.lane.b32.xlu0 %v361, 68
        %v1303 = vpop.permute.xlu0 %1302
        %vm1304 = vcmask 556032
        %v1305 = vsel %vm1304, %v1301, %v1303
        %v1309 = vmul.f32 %v350, %v1301
        %v1310 = vmul.f32 %v346, %v1305
        %v1311 = vmul.f32 %v351, %v1303
        %1315 = vrot.lane.b32.xlu0 %v1309, 60
        %v1316 = vpop.permute.xlu0 %1315
        %1317 = vrot.lane.b32.xlu0 %v1310, 60
        %v1318 = vpop.permute.xlu0 %1317
        %1319 = vrot.lane.b32.xlu0 %v1311, 60
        %v1320 = vpop.permute.xlu0 %1319
        %vm1321 = vcmask 490496
        %v1322 = vsel %vm1321, %v1316, %v1318
        %v1323 = vsel %vm1321, %v1318, %v1320
        %v1326 = vadd.f32 %v1296, %v1322
        %v1327 = vadd.f32 %v1297, %v1323
        %v1328 = vrot.slane %v360, 1
        %v1329 = vrot.slane %v361, 1
        %1330 = vrot.lane.b32.xlu0 %v1328, 69
        %v1331 = vpop.permute.xlu0 %1330
        %1332 = vrot.lane.b32.xlu0 %v1329, 69
        %v1333 = vpop.permute.xlu0 %1332
        %vm1334 = vcmask 564224
        %v1335 = vsel %vm1334, %v1331, %v1333
        %v1339 = vmul.f32 %v350, %v1331
        %v1340 = vmul.f32 %v346, %v1335
        %v1341 = vmul.f32 %v351, %v1333
        %1345 = vrot.lane.b32.xlu0 %v1339, 59
        %v1346 = vpop.permute.xlu0 %1345
        %1347 = vrot.lane.b32.xlu0 %v1340, 59
        %v1348 = vpop.permute.xlu0 %1347
        %1349 = vrot.lane.b32.xlu0 %v1341, 59
        %v1350 = vpop.permute.xlu0 %1349
        %vm1351 = vcmask 482304
        %v1352 = vsel %vm1351, %v1346, %v1348
        %v1353 = vsel %vm1351, %v1348, %v1350
        %v1356 = vadd.f32 %v1326, %v1352
        %v1357 = vadd.f32 %v1327, %v1353
        %v1358 = vrot.slane %v360, 2
        %v1359 = vrot.slane %v361, 2
        %1360 = vrot.lane.b32.xlu0 %v1358, 70
        %v1361 = vpop.permute.xlu0 %1360
        %1362 = vrot.lane.b32.xlu0 %v1359, 70
        %v1363 = vpop.permute.xlu0 %1362
        %vm1364 = vcmask 572416
        %v1365 = vsel %vm1364, %v1361, %v1363
        %v1369 = vmul.f32 %v350, %v1361
        %v1370 = vmul.f32 %v346, %v1365
        %v1371 = vmul.f32 %v351, %v1363
        %1375 = vrot.lane.b32.xlu0 %v1369, 58
        %v1376 = vpop.permute.xlu0 %1375
        %1377 = vrot.lane.b32.xlu0 %v1370, 58
        %v1378 = vpop.permute.xlu0 %1377
        %1379 = vrot.lane.b32.xlu0 %v1371, 58
        %v1380 = vpop.permute.xlu0 %1379
        %vm1381 = vcmask 474112
        %v1382 = vsel %vm1381, %v1376, %v1378
        %v1383 = vsel %vm1381, %v1378, %v1380
        %v1386 = vadd.f32 %v1356, %v1382
        %v1387 = vadd.f32 %v1357, %v1383
        %v1388 = vrot.slane %v360, 3
        %v1389 = vrot.slane %v361, 3
        %1390 = vrot.lane.b32.xlu0 %v1388, 80
        %v1391 = vpop.permute.xlu0 %1390
        %1392 = vrot.lane.b32.xlu0 %v1389, 80
        %v1393 = vpop.permute.xlu0 %1392
        %v1394 = vsel %vm993, %v1391, %v1393
        %v1398 = vmul.f32 %v350, %v1391
        %v1399 = vmul.f32 %v346, %v1394
        %v1400 = vmul.f32 %v351, %v1393
        %1404 = vrot.lane.b32.xlu0 %v1398, 48
        %v1405 = vpop.permute.xlu0 %1404
        %1406 = vrot.lane.b32.xlu0 %v1399, 48
        %v1407 = vpop.permute.xlu0 %1406
        %1408 = vrot.lane.b32.xlu0 %v1400, 48
        %v1409 = vpop.permute.xlu0 %1408
        %v1410 = vsel %vm976, %v1405, %v1407
        %v1411 = vsel %vm976, %v1407, %v1409
        %v1414 = vadd.f32 %v1386, %v1410
        %v1415 = vadd.f32 %v1387, %v1411
        %v1416 = vrot.slane %v360, 4
        %v1417 = vrot.slane %v361, 4
        %1418 = vrot.lane.b32.xlu0 %v1416, 81
        %v1419 = vpop.permute.xlu0 %1418
        %1420 = vrot.lane.b32.xlu0 %v1417, 81
        %v1421 = vpop.permute.xlu0 %1420
        %vm1422 = vcmask 662528
        %v1423 = vsel %vm1422, %v1419, %v1421
        %v1427 = vmul.f32 %v350, %v1419
        %v1428 = vmul.f32 %v346, %v1423
        %v1429 = vmul.f32 %v351, %v1421
        %1433 = vrot.lane.b32.xlu0 %v1427, 47
        %v1434 = vpop.permute.xlu0 %1433
        %1435 = vrot.lane.b32.xlu0 %v1428, 47
        %v1436 = vpop.permute.xlu0 %1435
        %1437 = vrot.lane.b32.xlu0 %v1429, 47
        %v1438 = vpop.permute.xlu0 %1437
        %vm1439 = vcmask 384000
        %v1440 = vsel %vm1439, %v1434, %v1436
        %v1441 = vsel %vm1439, %v1436, %v1438
        %v1444 = vadd.f32 %v1414, %v1440
        %v1445 = vadd.f32 %v1415, %v1441
        %v1446 = vrot.slane %v360, 5
        %v1447 = vrot.slane %v361, 5
        %1448 = vrot.lane.b32.xlu0 %v1446, 82
        %v1449 = vpop.permute.xlu0 %1448
        %1450 = vrot.lane.b32.xlu0 %v1447, 82
        %v1451 = vpop.permute.xlu0 %1450
        %vm1452 = vcmask 670720
        %v1453 = vsel %vm1452, %v1449, %v1451
        %v1457 = vmul.f32 %v350, %v1449
        %v1458 = vmul.f32 %v346, %v1453
        %v1459 = vmul.f32 %v351, %v1451
        %1463 = vrot.lane.b32.xlu0 %v1457, 46
        %v1464 = vpop.permute.xlu0 %1463
        %1465 = vrot.lane.b32.xlu0 %v1458, 46
        %v1466 = vpop.permute.xlu0 %1465
        %1467 = vrot.lane.b32.xlu0 %v1459, 46
        %v1468 = vpop.permute.xlu0 %1467
        %vm1469 = vcmask 375808
        %v1470 = vsel %vm1469, %v1464, %v1466
        %v1471 = vsel %vm1469, %v1466, %v1468
        %v1474 = vadd.f32 %v1444, %v1470
        %v1475 = vadd.f32 %v1445, %v1471
        %v1476 = vrot.slane %v360, 6
        %v1477 = vrot.slane %v361, 6
        %1478 = vrot.lane.b32.xlu0 %v1476, 83
        %v1479 = vpop.permute.xlu0 %1478
        %1480 = vrot.lane.b32.xlu0 %v1477, 83
        %v1481 = vpop.permute.xlu0 %1480
        %vm1482 = vcmask 678912
        %v1483 = vsel %vm1482, %v1479, %v1481
        %v1487 = vmul.f32 %v350, %v1479
        %v1488 = vmul.f32 %v346, %v1483
        %v1489 = vmul.f32 %v351, %v1481
        %1493 = vrot.lane.b32.xlu0 %v1487, 45
        %v1494 = vpop.permute.xlu0 %1493
        %1495 = vrot.lane.b32.xlu0 %v1488, 45
        %v1496 = vpop.permute.xlu0 %1495
        %1497 = vrot.lane.b32.xlu0 %v1489, 45
        %v1498 = vpop.permute.xlu0 %1497
        %vm1499 = vcmask 367616
        %v1500 = vsel %vm1499, %v1494, %v1496
        %v1501 = vsel %vm1499, %v1496, %v1498
        %v1504 = vadd.f32 %v1474, %v1500
        %v1505 = vadd.f32 %v1475, %v1501
        %v1506 = vrot.slane %v360, 7
        %v1507 = vrot.slane %v361, 7
        %1508 = vrot.lane.b32.xlu0 %v1506, 84
        %v1509 = vpop.permute.xlu0 %1508
        %1510 = vrot.lane.b32.xlu0 %v1507, 84
        %v1511 = vpop.permute.xlu0 %1510
        %vm1512 = vcmask 687104
        %v1513 = vsel %vm1512, %v1509, %v1511
        %v1517 = vmul.f32 %v350, %v1509
        %v1518 = vmul.f32 %v346, %v1513
        %v1519 = vmul.f32 %v351, %v1511
        %1523 = vrot.lane.b32.xlu0 %v1517, 44
        %v1524 = vpop.permute.xlu0 %1523
        %1525 = vrot.lane.b32.xlu0 %v1518, 44
        %v1526 = vpop.permute.xlu0 %1525
        %1527 = vrot.lane.b32.xlu0 %v1519, 44
        %v1528 = vpop.permute.xlu0 %1527
        %vm1529 = vcmask 359424
        %v1530 = vsel %vm1529, %v1524, %v1526
        %v1531 = vsel %vm1529, %v1526, %v1528
        %v1534 = vadd.f32 %v1504, %v1530
        %v1535 = vadd.f32 %v1505, %v1531
        %1538 = vrot.lane.b32.xlu0 %v362, 85
        %v1539 = vpop.permute.xlu0 %1538
        %1540 = vrot.lane.b32.xlu0 %v363, 85
        %v1541 = vpop.permute.xlu0 %1540
        %vm1542 = vcmask 695296
        %v1543 = vsel %vm1542, %v1539, %v1541
        %v1547 = vmul.f32 %v350, %v1539
        %v1548 = vmul.f32 %v346, %v1543
        %v1549 = vmul.f32 %v351, %v1541
        %1553 = vrot.lane.b32.xlu0 %v1547, 43
        %v1554 = vpop.permute.xlu0 %1553
        %1555 = vrot.lane.b32.xlu0 %v1548, 43
        %v1556 = vpop.permute.xlu0 %1555
        %1557 = vrot.lane.b32.xlu0 %v1549, 43
        %v1558 = vpop.permute.xlu0 %1557
        %vm1559 = vcmask 351232
        %v1560 = vsel %vm1559, %v1554, %v1556
        %v1561 = vsel %vm1559, %v1556, %v1558
        %v1564 = vadd.f32 %v1534, %v1560
        %v1565 = vadd.f32 %v1535, %v1561
        %v1566 = vrot.slane %v362, 1
        %v1567 = vrot.slane %v363, 1
        %1568 = vrot.lane.b32.xlu0 %v1566, 86
        %v1569 = vpop.permute.xlu0 %1568
        %1570 = vrot.lane.b32.xlu0 %v1567, 86
        %v1571 = vpop.permute.xlu0 %1570
        %vm1572 = vcmask 703488
        %v1573 = vsel %vm1572, %v1569, %v1571
        %v1577 = vmul.f32 %v350, %v1569
        %v1578 = vmul.f32 %v346, %v1573
        %v1579 = vmul.f32 %v351, %v1571
        %1583 = vrot.lane.b32.xlu0 %v1577, 42
        %v1584 = vpop.permute.xlu0 %1583
        %1585 = vrot.lane.b32.xlu0 %v1578, 42
        %v1586 = vpop.permute.xlu0 %1585
        %1587 = vrot.lane.b32.xlu0 %v1579, 42
        %v1588 = vpop.permute.xlu0 %1587
        %vm1589 = vcmask 343040
        %v1590 = vsel %vm1589, %v1584, %v1586
        %v1591 = vsel %vm1589, %v1586, %v1588
        %v1594 = vadd.f32 %v1564, %v1590
        %v1595 = vadd.f32 %v1565, %v1591
        %v1596 = vrot.slane %v362, 2
        %v1597 = vrot.slane %v363, 2
        %1598 = vrot.lane.b32.xlu0 %v1596, 96
        %v1599 = vpop.permute.xlu0 %1598
        %1600 = vrot.lane.b32.xlu0 %v1597, 96
        %v1601 = vpop.permute.xlu0 %1600
        %v1602 = vsel %vm783, %v1599, %v1601
        %v1606 = vmul.f32 %v350, %v1599
        %v1607 = vmul.f32 %v346, %v1602
        %v1608 = vmul.f32 %v351, %v1601
        %1612 = vrot.lane.b32.xlu0 %v1606, 32
        %v1613 = vpop.permute.xlu0 %1612
        %1614 = vrot.lane.b32.xlu0 %v1607, 32
        %v1615 = vpop.permute.xlu0 %1614
        %1616 = vrot.lane.b32.xlu0 %v1608, 32
        %v1617 = vpop.permute.xlu0 %1616
        %v1618 = vsel %vm766, %v1613, %v1615
        %v1619 = vsel %vm766, %v1615, %v1617
        %v1622 = vadd.f32 %v1594, %v1618
        %v1623 = vadd.f32 %v1595, %v1619
        %v1624 = vrot.slane %v362, 3
        %v1625 = vrot.slane %v363, 3
        %1626 = vrot.lane.b32.xlu0 %v1624, 97
        %v1627 = vpop.permute.xlu0 %1626
        %1628 = vrot.lane.b32.xlu0 %v1625, 97
        %v1629 = vpop.permute.xlu0 %1628
        %vm1630 = vcmask 793600
        %v1631 = vsel %vm1630, %v1627, %v1629
        %v1635 = vmul.f32 %v350, %v1627
        %v1636 = vmul.f32 %v346, %v1631
        %v1637 = vmul.f32 %v351, %v1629
        %1641 = vrot.lane.b32.xlu0 %v1635, 31
        %v1642 = vpop.permute.xlu0 %1641
        %1643 = vrot.lane.b32.xlu0 %v1636, 31
        %v1644 = vpop.permute.xlu0 %1643
        %1645 = vrot.lane.b32.xlu0 %v1637, 31
        %v1646 = vpop.permute.xlu0 %1645
        %vm1647 = vcmask 252928
        %v1648 = vsel %vm1647, %v1642, %v1644
        %v1649 = vsel %vm1647, %v1644, %v1646
        %v1652 = vadd.f32 %v1622, %v1648
        %v1653 = vadd.f32 %v1623, %v1649
        %v1654 = vrot.slane %v362, 4
        %v1655 = vrot.slane %v363, 4
        %1656 = vrot.lane.b32.xlu0 %v1654, 98
        %v1657 = vpop.permute.xlu0 %1656
        %1658 = vrot.lane.b32.xlu0 %v1655, 98
        %v1659 = vpop.permute.xlu0 %1658
        %vm1660 = vcmask 801792
        %v1661 = vsel %vm1660, %v1657, %v1659
        %v1665 = vmul.f32 %v350, %v1657
        %v1666 = vmul.f32 %v346, %v1661
        %v1667 = vmul.f32 %v351, %v1659
        %1671 = vrot.lane.b32.xlu0 %v1665, 30
        %v1672 = vpop.permute.xlu0 %1671
        %1673 = vrot.lane.b32.xlu0 %v1666, 30
        %v1674 = vpop.permute.xlu0 %1673
        %1675 = vrot.lane.b32.xlu0 %v1667, 30
        %v1676 = vpop.permute.xlu0 %1675
        %vm1677 = vcmask 244736
        %v1678 = vsel %vm1677, %v1672, %v1674
        %v1679 = vsel %vm1677, %v1674, %v1676
        %v1682 = vadd.f32 %v1652, %v1678
        %v1683 = vadd.f32 %v1653, %v1679
        %v1684 = vrot.slane %v362, 5
        %v1685 = vrot.slane %v363, 5
        %1686 = vrot.lane.b32.xlu0 %v1684, 99
        %v1687 = vpop.permute.xlu0 %1686
        %1688 = vrot.lane.b32.xlu0 %v1685, 99
        %v1689 = vpop.permute.xlu0 %1688
        %vm1690 = vcmask 809984
        %v1691 = vsel %vm1690, %v1687, %v1689
        %v1695 = vmul.f32 %v350, %v1687
        %v1696 = vmul.f32 %v346, %v1691
        %v1697 = vmul.f32 %v351, %v1689
        %1701 = vrot.lane.b32.xlu0 %v1695, 29
        %v1702 = vpop.permute.xlu0 %1701
        %1703 = vrot.lane.b32.xlu0 %v1696, 29
        %v1704 = vpop.permute.xlu0 %1703
        %1705 = vrot.lane.b32.xlu0 %v1697, 29
        %v1706 = vpop.permute.xlu0 %1705
        %vm1707 = vcmask 236544
        %v1708 = vsel %vm1707, %v1702, %v1704
        %v1709 = vsel %vm1707, %v1704, %v1706
        %v1712 = vadd.f32 %v1682, %v1708
        %v1713 = vadd.f32 %v1683, %v1709
        %v1714 = vrot.slane %v362, 6
        %v1715 = vrot.slane %v363, 6
        %1716 = vrot.lane.b32.xlu0 %v1714, 100
        %v1717 = vpop.permute.xlu0 %1716
        %1718 = vrot.lane.b32.xlu0 %v1715, 100
        %v1719 = vpop.permute.xlu0 %1718
        %vm1720 = vcmask 818176
        %v1721 = vsel %vm1720, %v1717, %v1719
        %v1725 = vmul.f32 %v350, %v1717
        %v1726 = vmul.f32 %v346, %v1721
        %v1727 = vmul.f32 %v351, %v1719
        %1731 = vrot.lane.b32.xlu0 %v1725, 28
        %v1732 = vpop.permute.xlu0 %1731
        %1733 = vrot.lane.b32.xlu0 %v1726, 28
        %v1734 = vpop.permute.xlu0 %1733
        %1735 = vrot.lane.b32.xlu0 %v1727, 28
        %v1736 = vpop.permute.xlu0 %1735
        %vm1737 = vcmask 228352
        %v1738 = vsel %vm1737, %v1732, %v1734
        %v1739 = vsel %vm1737, %v1734, %v1736
        %v1742 = vadd.f32 %v1712, %v1738
        %v1743 = vadd.f32 %v1713, %v1739
        %v1744 = vrot.slane %v362, 7
        %v1745 = vrot.slane %v363, 7
        %1746 = vrot.lane.b32.xlu0 %v1744, 101
        %v1747 = vpop.permute.xlu0 %1746
        %1748 = vrot.lane.b32.xlu0 %v1745, 101
        %v1749 = vpop.permute.xlu0 %1748
        %vm1750 = vcmask 826368
        %v1751 = vsel %vm1750, %v1747, %v1749
        %v1755 = vmul.f32 %v350, %v1747
        %v1756 = vmul.f32 %v346, %v1751
        %v1757 = vmul.f32 %v351, %v1749
        %1761 = vrot.lane.b32.xlu0 %v1755, 27
        %v1762 = vpop.permute.xlu0 %1761
        %1763 = vrot.lane.b32.xlu0 %v1756, 27
        %v1764 = vpop.permute.xlu0 %1763
        %1765 = vrot.lane.b32.xlu0 %v1757, 27
        %v1766 = vpop.permute.xlu0 %1765
        %vm1767 = vcmask 220160
        %v1768 = vsel %vm1767, %v1762, %v1764
        %v1769 = vsel %vm1767, %v1764, %v1766
        %v1772 = vadd.f32 %v1742, %v1768
        %v1773 = vadd.f32 %v1743, %v1769
        %1776 = vrot.lane.b32.xlu0 %v364, 102
        %v1777 = vpop.permute.xlu0 %1776
        %1778 = vrot.lane.b32.xlu0 %v365, 102
        %v1779 = vpop.permute.xlu0 %1778
        %vm1780 = vcmask 834560
        %v1781 = vsel %vm1780, %v1777, %v1779
        %v1785 = vmul.f32 %v350, %v1777
        %v1786 = vmul.f32 %v346, %v1781
        %v1787 = vmul.f32 %v351, %v1779
        %1791 = vrot.lane.b32.xlu0 %v1785, 26
        %v1792 = vpop.permute.xlu0 %1791
        %1793 = vrot.lane.b32.xlu0 %v1786, 26
        %v1794 = vpop.permute.xlu0 %1793
        %1795 = vrot.lane.b32.xlu0 %v1787, 26
        %v1796 = vpop.permute.xlu0 %1795
        %vm1797 = vcmask 211968
        %v1798 = vsel %vm1797, %v1792, %v1794
        %v1799 = vsel %vm1797, %v1794, %v1796
        %v1802 = vadd.f32 %v1772, %v1798
        %v1803 = vadd.f32 %v1773, %v1799
        %v1804 = vsub.f32 0.0, %v1802
        %v1805 = vsub.f32 0.0, %v1803
        %v1806 = vmul.f32 %v1804, 1.442695
        %v1807 = vpow.pop %v1806
        %v1808 = vmul.f32 %v1805, 1.442695
        %v1809 = vpow.pop %v1808
        %v1810 = vadd.f32 %v1807, 1.0
        %v1811 = vadd.f32 %v1809, 1.0
        %v1812 = vrcp.pop %v1810
        %v1813 = vmul.f32 1.0, %v1812
        %v1814 = vrcp.pop %v1811
        %v1815 = vmul.f32 1.0, %v1814
        %v1816 = vlaneseq
        %v1817 = vshrl.u32 %v1816, 7
        %v1818 = vsub.s32 0, %v1817
        %v1819 = vrot.slane %v1813, %v1818
        %v1820 = vlaneseq
        %v1821 = vshrl.u32 %v1820, 7
        %v1822 = vsub.s32 0, %v1821
        %v1823 = vrot.slane %v1815, %v1822
        %v1824 = vmul.f32 %v313, %v1819
        %v1825 = vmul.f32 %v314, %v1823
        %v1826 = vmul.f32 %v315, %v1819
        %v1827 = vmul.f32 %v316, %v1823
        %v1828 = vmul.f32 %v317, %v1819
        %v1829 = vmul.f32 %v318, %v1823
        %v1830 = vmul.f32 %v319, %v1819
        %v1831 = vmul.f32 %v320, %v1823
        %v1832 = vadd.f32 %v1824, %v297
        %v1833 = vadd.f32 %v1825, %v298
        %v1834 = vadd.f32 %v1826, %v299
        %v1835 = vadd.f32 %v1827, %v300
        %v1836 = vadd.f32 %v1828, %v301
        %v1837 = vadd.f32 %v1829, %v302
        %v1838 = vadd.f32 %v1830, %v303
        %v1839 = vadd.f32 %v1831, %v304
        %v1840 = vmax.f32 %v1832, %v1833
        %1841 = vmax.xlane.f32.xlu0 %v1840
        %v1842 = vpop.xlane.xlu0 %1841
        %v1843 = vmax.f32 %v1834, %v1835
        %1844 = vmax.xlane.f32.xlu0 %v1843
        %v1845 = vpop.xlane.xlu0 %1844
        %v1846 = vmax.f32 %v1836, %v1837
        %1847 = vmax.xlane.f32.xlu0 %v1846
        %v1848 = vpop.xlane.xlu0 %1847
        %v1849 = vmax.f32 %v1838, %v1839
        %1850 = vmax.xlane.f32.xlu0 %v1849
        %v1851 = vpop.xlane.xlu0 %1850
        %v1852 = vld [vmem:[%s2] sm:$0xff]
        %v1853 = vld [vmem:[%s2 + $0x8] sm:$0xff]
        %v1854 = vld [vmem:[%s2 + $0x10] sm:$0xff]
        %v1855 = vld [vmem:[%s2 + $0x18] sm:$0xff]
        %v1860 = vlaneseq
        %v1861 = vand.u32 %v1860, 127
        %v1862 = vlaneseq
        %v1863 = vshrl.u32 %v1862, 7
        %v1864 = vsub.s32 %v1861, %v1863
        %v1865 = vrot.slane %v1842, %v1864
        %v1866 = vadd.s32 %v1861, 4294967288
        %v1867 = vlaneseq
        %v1868 = vshrl.u32 %v1867, 7
        %v1869 = vsub.s32 %v1866, %v1868
        %v1870 = vrot.slane %v1845, %v1869
        %vm1871 = vcmask 130112
        %v1872 = vsel %vm1871, %v1870, %v1865
        %v1873 = vadd.s32 %v1861, 4294967280
        %v1874 = vlaneseq
        %v1875 = vshrl.u32 %v1874, 7
        %v1876 = vsub.s32 %v1873, %v1875
        %v1877 = vrot.slane %v1848, %v1876
        %vm1878 = vcmask 195712
        %v1879 = vsel %vm1878, %v1877, %v1872
        %v1880 = vadd.s32 %v1861, 4294967272
        %v1881 = vlaneseq
        %v1882 = vshrl.u32 %v1881, 7
        %v1883 = vsub.s32 %v1880, %v1882
        %v1884 = vrot.slane %v1851, %v1883
        %vm1885 = vcmask 261312
        %v1886 = vsel %vm1885, %v1884, %v1879
        %v1887 = vsel %vm766, %v1886, 0
        %1889 = vmatprep.subr.mxu0 0.0
        %1890 = vmatpush1.msra.mxu0 %v1852
        %1891 = vmatprep.subr.mxu0 0.0
        %1892 = vmatpush1.msra.mxu0 %v1853
        %1893 = vmatprep.subr.mxu0 0.0
        %1894 = vmatpush1.msra.mxu0 %v1854
        %1895 = vmatprep.subr.mxu0 0.0
        %1896 = vmatpush1.msra.mxu0 %v1855
        %1897 = vmatprep.subr.mxu0 0.0
        %1898 = vmatpush1.msra.mxu0 0.0
        %1899 = vmatprep.subr.mxu0 0.0
        %1900 = vmatpush1.msra.mxu0 0.0
        %1901 = vmatprep.subr.mxu0 0.0
        %1902 = vmatpush1.msra.mxu0 0.0
        %1903 = vmatprep.subr.mxu0 0.0
        %1904 = vmatpush1.msra.mxu0 0.0
        %1905 = vmatprep.subr.mxu0 0.0
        %1906 = vmatpush1.msra.mxu0 0.0
        %1907 = vmatprep.subr.mxu0 0.0
        %1908 = vmatpush1.msra.mxu0 0.0
        %1909 = vmatprep.subr.mxu0 0.0
        %1910 = vmatpush1.msra.mxu0 0.0
        %1911 = vmatprep.subr.mxu0 0.0
        %1912 = vmatpush1.msra.mxu0 0.0
        %1913 = vmatprep.subr.mxu0 0.0
        %1914 = vmatpush1.msra.mxu0 0.0
        %1915 = vmatprep.subr.mxu0 0.0
        %1916 = vmatpush1.msra.mxu0 0.0
        %1917 = vmatprep.subr.mxu0 0.0
        %1918 = vmatpush1.msra.mxu0 0.0
        %1919 = vmatprep.subr.mxu0 0.0
        %1920 = vmatpush1.msra.mxu0 0.0
        %1921 = vmatprep.subr.mxu0 0.0
        %1922 = vmatpush1.msra.mxu0 0.0
        %1923 = vmatprep.subr.mxu0 0.0
        %1924 = vmatpush1.msra.mxu0 0.0
        %1925 = vmatprep.subr.mxu0 0.0
        %1926 = vmatpush1.msra.mxu0 0.0
        %1927 = vmatprep.subr.mxu0 0.0
        %1928 = vmatpush1.msra.mxu0 0.0
        %1929 = vmatprep.subr.mxu0 0.0
        %1930 = vmatpush1.msra.mxu0 0.0
        %1931 = vmatprep.subr.mxu0 0.0
        %1932 = vmatpush1.msra.mxu0 0.0
        %1933 = vmatprep.subr.mxu0 0.0
        %1934 = vmatpush1.msra.mxu0 0.0
        %1935 = vmatprep.subr.mxu0 0.0
        %1936 = vmatpush1.msra.mxu0 0.0
        %1937 = vmatprep.subr.mxu0 0.0
        %1938 = vmatpush1.msra.mxu0 0.0
        %1939 = vmatprep.subr.mxu0 0.0
        %1940 = vmatpush1.msra.mxu0 0.0
        %1941 = vmatprep.subr.mxu0 0.0
        %1942 = vmatpush1.msra.mxu0 0.0
        %1943 = vmatprep.subr.mxu0 0.0
        %1944 = vmatpush1.msra.mxu0 0.0
        %1945 = vmatprep.subr.mxu0 0.0
        %1946 = vmatpush1.msra.mxu0 0.0
        %1947 = vmatprep.subr.mxu0 0.0
        %1948 = vmatpush1.msra.mxu0 0.0
        %1949 = vmatprep.subr.mxu0 0.0
        %1950 = vmatpush1.msra.mxu0 0.0
        %1951 = vmatprep.subr.mxu0 0.0
        %1952 = vmatpush1.msra.mxu0 0.0
        %1953 = vmatprep.mubr.f32.mxu0 0.0
        %1954 = vmatmul.mubr.f32.gmra.mrb[0].mxu0 %v1887
        %v1955 = vpop.f32.mrb[0].mxu0
        %v1956 = vadd.f32 0.0, %v1955
        %v1957 = vpop.f32.mrb[0].mxu0
        %1958 = vdwg.mxu0
        %v1959 = vmax.f32 %v1956, 0.0
        %v1960 = vld [vmem:[%s3] sm:$0x3]
        %v1962 = vsel %vm406, %v1959, 0
        %vm1964 = vcmask 1041408
        %v1966 = vsel %vm1964, %v1960, 0
        %1968 = vmatprep.subr.mxu0 0.0
        %1969 = vmatpush1.msra.mxu0 %v1966
        %1970 = vmatprep.subr.mxu0 0.0
        %1971 = vmatpush1.msra.mxu0 0.0
        %1972 = vmatprep.subr.mxu0 0.0
        %1973 = vmatpush1.msra.mxu0 0.0
        %1974 = vmatprep.subr.mxu0 0.0
        %1975 = vmatpush1.msra.mxu0 0.0
        %1976 = vmatprep.subr.mxu0 0.0
        %1977 = vmatpush1.msra.mxu0 0.0
        %1978 = vmatprep.subr.mxu0 0.0
        %1979 = vmatpush1.msra.mxu0 0.0
        %1980 = vmatprep.subr.mxu0 0.0
        %1981 = vmatpush1.msra.mxu0 0.0
        %1982 = vmatprep.subr.mxu0 0.0
        %1983 = vmatpush1.msra.mxu0 0.0
        %1984 = vmatprep.subr.mxu0 0.0
        %1985 = vmatpush1.msra.mxu0 0.0
        %1986 = vmatprep.subr.mxu0 0.0
        %1987 = vmatpush1.msra.mxu0 0.0
        %1988 = vmatprep.subr.mxu0 0.0
        %1989 = vmatpush1.msra.mxu0 0.0
        %1990 = vmatprep.subr.mxu0 0.0
        %1991 = vmatpush1.msra.mxu0 0.0
        %1992 = vmatprep.subr.mxu0 0.0
        %1993 = vmatpush1.msra.mxu0 0.0
        %1994 = vmatprep.subr.mxu0 0.0
        %1995 = vmatpush1.msra.mxu0 0.0
        %1996 = vmatprep.subr.mxu0 0.0
        %1997 = vmatpush1.msra.mxu0 0.0
        %1998 = vmatprep.subr.mxu0 0.0
        %1999 = vmatpush1.msra.mxu0 0.0
        %2000 = vmatprep.subr.mxu0 0.0
        %2001 = vmatpush1.msra.mxu0 0.0
        %2002 = vmatprep.subr.mxu0 0.0
        %2003 = vmatpush1.msra.mxu0 0.0
        %2004 = vmatprep.subr.mxu0 0.0
        %2005 = vmatpush1.msra.mxu0 0.0
        %2006 = vmatprep.subr.mxu0 0.0
        %2007 = vmatpush1.msra.mxu0 0.0
        %2008 = vmatprep.subr.mxu0 0.0
        %2009 = vmatpush1.msra.mxu0 0.0
        %2010 = vmatprep.subr.mxu0 0.0
        %2011 = vmatpush1.msra.mxu0 0.0
        %2012 = vmatprep.subr.mxu0 0.0
        %2013 = vmatpush1.msra.mxu0 0.0
        %2014 = vmatprep.subr.mxu0 0.0
        %2015 = vmatpush1.msra.mxu0 0.0
        %2016 = vmatprep.subr.mxu0 0.0
        %2017 = vmatpush1.msra.mxu0 0.0
        %2018 = vmatprep.subr.mxu0 0.0
        %2019 = vmatpush1.msra.mxu0 0.0
        %2020 = vmatprep.subr.mxu0 0.0
        %2021 = vmatpush1.msra.mxu0 0.0
        %2022 = vmatprep.subr.mxu0 0.0
        %2023 = vmatpush1.msra.mxu0 0.0
        %2024 = vmatprep.subr.mxu0 0.0
        %2025 = vmatpush1.msra.mxu0 0.0
        %2026 = vmatprep.subr.mxu0 0.0
        %2027 = vmatpush1.msra.mxu0 0.0
        %2028 = vmatprep.subr.mxu0 0.0
        %2029 = vmatpush1.msra.mxu0 0.0
        %2030 = vmatprep.subr.mxu0 0.0
        %2031 = vmatpush1.msra.mxu0 0.0
        %2032 = vmatprep.mubr.f32.mxu0 0.0
        %2033 = vmatmul.mubr.f32.gmra.mrb[0].mxu0 %v1962
        %v2034 = vpop.f32.mrb[0].mxu0
        %v2035 = vadd.f32 0.0, %v2034
        %v2036 = vpop.f32.mrb[0].mxu0
        %2037 = vdwg.mxu0
        %v2038 = vsub.f32 0.0, %v2035
        %v2039 = vmul.f32 %v2038, 1.442695
        %v2040 = vpow.pop %v2039
        %v2041 = vadd.f32 %v2040, 1.0
        %v2042 = vrcp.pop %v2041
        %v2043 = vmul.f32 1.0, %v2042
        %v2044 = vlaneseq
        %v2045 = vshrl.u32 %v2044, 7
        %v2046 = vsub.s32 0, %v2045
        %v2047 = vrot.slane %v2043, %v2046
        %2049 = vbcast.lane.b32.xlu0 %v2047, 256
        %v2050 = vpop.permute.xlu0 %2049
        %s2052 = sor.u32 256, 8
        %2053 = vbcast.lane.b32.xlu0 %v2047, %s2052
        %v2054 = vpop.permute.xlu0 %2053
        %s2056 = sor.u32 256, 16
        %2057 = vbcast.lane.b32.xlu0 %v2047, %s2056
        %v2058 = vpop.permute.xlu0 %2057
        %s2060 = sor.u32 256, 24
        %2061 = vbcast.lane.b32.xlu0 %v2047, %s2060
        %v2062 = vpop.permute.xlu0 %2061
        %v2063 = vmul.f32 %v1832, %v2050
        %v2064 = vmul.f32 %v1833, %v2050
        %v2065 = vmul.f32 %v1834, %v2054
        %v2066 = vmul.f32 %v1835, %v2054
        %v2067 = vmul.f32 %v1836, %v2058
        %v2068 = vmul.f32 %v1837, %v2058
        %v2069 = vmul.f32 %v1838, %v2062
        %v2070 = vmul.f32 %v1839, %v2062
        %v2071 = vadd.f32 %v2063, %v297
        %v2072 = vadd.f32 %v2064, %v298
        %v2073 = vadd.f32 %v2065, %v299
        %v2074 = vadd.f32 %v2066, %v300
        %v2075 = vadd.f32 %v2067, %v301
        %v2076 = vadd.f32 %v2068, %v302
        %v2077 = vadd.f32 %v2069, %v303
        %v2078 = vadd.f32 %v2070, %v304
        %2079 = vst [vmem:[%s296] sm:$0xff] %v2071
        %2080 = vst [vmem:[%s296 + $0x8] sm:$0xff] %v2072
        %2081 = vst [vmem:[%s296 + $0x10] sm:$0xff] %v2073
        %2082 = vst [vmem:[%s296 + $0x18] sm:$0xff] %v2074
        %2083 = vst [vmem:[%s296 + $0x20] sm:$0xff] %v2075
        %2084 = vst [vmem:[%s296 + $0x28] sm:$0xff] %v2076
        %2085 = vst [vmem:[%s296 + $0x30] sm:$0xff] %v2077
        %2086 = vst [vmem:[%s296 + $0x38] sm:$0xff] %v2078
        %s2087 = sand.u32 %s148, 1
        %s2088 = scalar_lea.sflag [#allocation4], %s2087
        %s2089 = sand.u32 %s148, 1
        %s2090 = smul.addr %s2089, 64
        %s2091 = scalar_lea.vmem [#allocation8], %s2090
        // Predicated region
        $region53: #{tpu_custom_call.1} parent=39 // pred_check
          %p2092 = pneg %p158
        $region54: #{tpu_custom_call.1} parent=39 // pred_check_branch
          %2094 = sbr.rel (%p2092) target = $region56
        $region55: #{tpu_custom_call.1} parent=39 // pred_region
          %s2096 = ssub.s32 1024, 1024
          %2097 = vsyncadd %s2088, %s2096
          %s2098 = smul.addr %s25, 8
          %s2099 = smul.addr %s2098, 128
          %s2100 = scalar_lea.hbm %s5, %s2099
          %s2101 = sshll.u32 %s2091, 4
          %s2102 = int_to_ptr.vmem [resolvable:$true] %s2101
          %2107 = dma.vmem_to_hbm [thread:$0]  %s2102, 1024, %s2100, %s2088, 256, 256, 16
        $region56: #{tpu_custom_call.1} parent=39 // pred_fallthru
          _
      $region40: #{tpu_custom_call.1} parent=5 // pred_fallthru
        _
      %p2108 = scmp.le.s32.totalorder 2, %s20
      // Predicated region
      $region57: #{tpu_custom_call.1} parent=5 // pred_check
        %p2109 = pneg %p2108
      $region58: #{tpu_custom_call.1} parent=5 // pred_check_branch
        %2111 = sbr.rel (%p2109) target = $region60
      $region59: #{tpu_custom_call.1} parent=5 // pred_region
        %s2112 = ssub.s32 %s20, 2
        // Predicated region
        $region61: #{tpu_custom_call.1} parent=59 // pred_check
          %p2113 = pneg %p164
        $region62: #{tpu_custom_call.1} parent=59 // pred_check_branch
          %2115 = sbr.rel (%p2113) target = $region64
        $region63: #{tpu_custom_call.1} parent=59 // pred_region
          %s2116 = sand.u32 %s149, 1
          %s2117 = scalar_lea.sflag [#allocation4], %s2116
          %s2118 = sand.u32 %s149, 1
          %s2119 = smul.addr %s2118, 64
          %s2120 = scalar_lea.vmem [#allocation8], %s2119
          %2121 = dma.done %s2117, 1024
        $region64: #{tpu_custom_call.1} parent=59 // pred_fallthru
          _
      $region60: #{tpu_custom_call.1} parent=5 // pred_fallthru
        _
    $region6: #{tpu_custom_call.1} parent=1 // loop_footer
      %s24 = sadd.s32 1, %s20
    $region7: #{tpu_custom_call.1} parent=1 // loop_footer_branch
      %19 = sbr.rel target = $region3
    $region8: #{tpu_custom_call.1} parent=1 // loop_exit
      _
    %2122 = vsyncpa [#allocation3], 1
    %s2123 = scalar_lea.sflag [#allocation3], 1
    %2124 = vsyncpa %s2123, 1
    %2125 = vsyncpa [#allocation6], 1
    %s2126 = scalar_lea.sflag [#allocation6], 1
    %2127 = vsyncpa %s2126, 1
    %2128 = vsyncpa [#allocation4], 1
    %s2129 = scalar_lea.sflag [#allocation4], 1
    %2130 = vsyncpa %s2129, 1

</llo_original>
